<compile_context>
chip_gen: v7x
topology: tpu7x:2x2x1
jax: 0.10.0
libtpu: 0.0.40
codegen_flags: <defaults>
</compile_context>

<pallas_src>
import functools

import jax
import jax.numpy as jnp
import numpy as np
from jax.experimental import pallas as pl
from jax.experimental.pallas import tpu as pltpu

EPS = 1e-8


# ---------------------------------------------------------------------------
# Per-layer kernel: InstanceNorm + AdaIN + ResCnn.  One grid step == one batch
# element; the whole (L, E) slab for that element lives in VMEM.
# ---------------------------------------------------------------------------
def _adaptive_decoder_layer_kernel(
    len_ref,                 # SMEM (B,) int32         -- scalar-prefetched lengths
    x_ref,                   # (1, L, E) f32           -- layer input
    spk_ref,                 # (1, E, 1) f32           -- speaker encoding (column)
    wg_ref, bg_ref,          # (E, E) f32, (1, E) f32  -- W_gamma^T, b_gamma
    wb_ref, bb_ref,          # (E, E) f32, (1, E) f32  -- W_beta^T,  b_beta
    w1_ref, b1_ref,          # (K*E, E) bf16, (1, E)   -- conv1 (tap-major flat)
    w2_ref, b2_ref,          # (K*E, E) bf16, (1, E)   -- conv2
    out_ref,                 # (1, L, E)
    stack_ref,               # VMEM (L, K*E) f32 scratch: shifted-tap stack
    *, ksize):
  L, E = x_ref.shape[1], x_ref.shape[2]
  half = ksize // 2
  b = pl.program_id(0)

  x = x_ref[0].astype(jnp.float32)                        # (L, E)

  # Valid length from SMEM; build keep-mask with an iota instead of streaming a
  # lane-sparse (L, 1) float mask from HBM.
  length_i = len_ref[b]
  length = jnp.maximum(length_i, 1).astype(jnp.float32)   # guard all-pad rows
  row = jax.lax.broadcasted_iota(jnp.int32, (L, 1), 0)
  keep = (row < length_i).astype(jnp.float32)             # (L, 1), 1.0 == valid

  # InstanceNorm stats, single sweep.  As in the PyTorch reference: sums run
  # over ALL positions, the divisor is the number of non-padded frames.
  s1 = jnp.sum(x, axis=0, keepdims=True)                  # (1, E)
  s2 = jnp.sum(x * x, axis=0, keepdims=True)              # (1, E)
  mean = s1 / length
  var = (s2 - 2.0 * mean * s1 + float(L) * (mean * mean)) / length
  var = jnp.maximum(var, 0.0)                             # guard fp cancellation
  std = jnp.sqrt(var + EPS)
  normed = (x - mean) / std * keep                        # masked_fill(pad, 0)

  # AdaIN: gamma/beta = Linear(speaker_encoding).  E x E is tiny, so do it as an
  # f32 broadcast-multiply + reduce (VPU/XLU) instead of a 1-row MXU matmul.
  spk = spk_ref[0].astype(jnp.float32)                    # (E, 1)
  gamma = jnp.sum(spk * wg_ref[...], axis=0, keepdims=True) + bg_ref[...]
  beta = jnp.sum(spk * wb_ref[...], axis=0, keepdims=True) + bb_ref[...]
  h = normed * gamma + beta        # beta also lands on padded rows, as in torch

  def conv1d_same(hin, w_ref, b_ref):
    # 'same' Conv1d along L as ONE wide MXU matmul: write the K shifted copies
    # of hin into the (L, K*E) VMEM stack (zero rows realise the zero padding),
    # then contract over K*E in bf16 with f32 accumulation.
    for k in range(ksize):
      s = half - k                          # stack[:, kE:(k+1)E][l] == hin[l-s]
      cb = slice(k * E, (k + 1) * E)
      n = L - abs(s)
      if n <= 0:
        stack_ref[:, cb] = jnp.zeros((L, E), jnp.float32)
      elif s > 0:
        stack_ref[0:s, cb] = jnp.zeros((s, E), jnp.float32)
        stack_ref[s:L, cb] = hin[0:n, :]
      elif s < 0:
        stack_ref[0:n, cb] = hin[-s:L, :]
        stack_ref[n:L, cb] = jnp.zeros((-s, E), jnp.float32)
      else:
        stack_ref[:, cb] = hin
    y = jnp.dot(stack_ref[...].astype(jnp.bfloat16), w_ref[...],
                preferred_element_type=jnp.float32)
    return y + b_ref[...]

  h1 = jnp.maximum(conv1d_same(h, w1_ref, b1_ref), 0.0)   # Dropout==id, ReLU
  h2 = conv1d_same(h1, w2_ref, b2_ref)
  out = (h2 + h) * keep                                   # residual + masked_fill
  out_ref[0] = out.astype(out_ref.dtype)


# ---------------------------------------------------------------------------
# Final Linear projection: lane-dense, row-tiled bf16 matmul.
# ---------------------------------------------------------------------------
def _linear_kernel(x_ref, w_ref, b_ref, o_ref):
  y = jnp.dot(x_ref[...].astype(jnp.bfloat16), w_ref[...],
              preferred_element_type=jnp.float32) + b_ref[...]
  o_ref[...] = y.astype(o_ref.dtype)


def _pick_row_tile(rows):
  for cand in (1024, 512, 256, 128, 64, 32, 16, 8):
    if rows % cand == 0:
      return cand
  return rows


def _decoder_layer(x, lengths, spk, lp, ksize):
  B, L, E = x.shape
  K = ksize
  assert K % 2 == 1, "kernel_size must be odd ('same' padding + residual add)"

  # PyTorch layouts -> kernel layouts (weights that feed the MXU become bf16).
  wg = jnp.transpose(lp["w_gamma"]).astype(jnp.float32)              # (in, out)
  bg = lp["b_gamma"].reshape(1, E).astype(jnp.float32)
  wb = jnp.transpose(lp["w_beta"]).astype(jnp.float32)
  bb = lp["b_beta"].reshape(1, E).astype(jnp.float32)
  # Conv1d weight (Cout, Cin, K) -> tap-major flattened (K*Cin, Cout).
  w1 = jnp.transpose(lp["conv1_w"], (2, 1, 0)).reshape(K * E, E).astype(jnp.bfloat16)
  b1 = lp["conv1_b"].reshape(1, E).astype(jnp.float32)
  w2 = jnp.transpose(lp["conv2_w"], (2, 1, 0)).reshape(K * E, E).astype(jnp.bfloat16)
  b2 = lp["conv2_b"].reshape(1, E).astype(jnp.float32)
  spk3 = spk.reshape(B, E, 1).astype(jnp.float32)

  grid_spec = pltpu.PrefetchScalarGridSpec(
      num_scalar_prefetch=1,                      # lengths -> SMEM
      grid=(B,),
      in_specs=[
          pl.BlockSpec((1, L, E), lambda b, lens: (b, 0, 0)),      # x
          pl.BlockSpec((1, E, 1), lambda b, lens: (b, 0, 0)),      # speaker enc
          pl.BlockSpec((E, E), lambda b, lens: (0, 0)),            # W_gamma^T
          pl.BlockSpec((1, E), lambda b, lens: (0, 0)),            # b_gamma
          pl.BlockSpec((E, E), lambda b, lens: (0, 0)),            # W_beta^T
          pl.BlockSpec((1, E), lambda b, lens: (0, 0)),            # b_beta
          pl.BlockSpec((K * E, E), lambda b, lens: (0, 0)),        # conv1 w
          pl.BlockSpec((1, E), lambda b, lens: (0, 0)),            # conv1 b
          pl.BlockSpec((K * E, E), lambda b, lens: (0, 0)),        # conv2 w
          pl.BlockSpec((1, E), lambda b, lens: (0, 0)),            # conv2 b
      ],
      out_specs=pl.BlockSpec((1, L, E), lambda b, lens: (b, 0, 0)),
      scratch_shapes=[pltpu.VMEM((L, K * E), jnp.float32)],
  )
  return pl.pallas_call(
      functools.partial(_adaptive_decoder_layer_kernel, ksize=K),
      out_shape=jax.ShapeDtypeStruct((B, L, E), x.dtype),
      grid_spec=grid_spec,
      compiler_params=pltpu.CompilerParams(dimension_semantics=("parallel",)),
  )(lengths, x, spk3, wg, bg, wb, bb, w1, b1, w2, b2)


def _final_linear(x, w, b):
  B, L, E = x.shape
  out_dims = w.shape[0]
  rows = B * L
  tr = _pick_row_tile(rows)
  x2 = x.reshape(rows, E)                                  # lane-dense slab
  wt = jnp.transpose(w).astype(jnp.bfloat16)               # (E, O)
  b2 = b.reshape(1, out_dims).astype(jnp.float32)
  out2 = pl.pallas_call(
      _linear_kernel,
      out_shape=jax.ShapeDtypeStruct((rows, out_dims), x.dtype),
      grid_spec=pltpu.PrefetchScalarGridSpec(
          num_scalar_prefetch=0,
          grid=(rows // tr,),
          in_specs=[
              pl.BlockSpec((tr, E), lambda r: (r, 0)),
              pl.BlockSpec((E, out_dims), lambda r: (0, 0)),
              pl.BlockSpec((1, out_dims), lambda r: (0, 0)),
          ],
          out_specs=pl.BlockSpec((tr, out_dims), lambda r: (r, 0)),
      ),
      compiler_params=pltpu.CompilerParams(dimension_semantics=("parallel",)),
  )(x2, wt, b2)
  return out2.reshape(B, L, out_dims)


@functools.partial(jax.jit, static_argnames=("kernel_sizes",))
def _adaptive_decoder_forward(inputs, lengths, speaker_encodings, layers_params,
                              linear_w, linear_b, *, kernel_sizes):
  # Faithful to the PyTorch forward: every layer consumes `inputs` (not the
  # previous layer's output), so only the last layer's result reaches the
  # final Linear.  We mirror that exactly.
  decoder_output = inputs
  for i, ksz in enumerate(kernel_sizes):
    decoder_output = _decoder_layer(inputs, lengths, speaker_encodings,
                                    layers_params[i], ksz)
  return _final_linear(decoder_output, linear_w, linear_b)


def adaptive_decoder(inputs, padding_mask, speaker_encodings, layers_params,
                     linear_w, linear_b, kernel_sizes):
  """inputs: (B, L, E) f32; padding_mask: (B, L) bool, True == pad (right-padded);
  speaker_encodings: (B, E) f32; parameters use PyTorch layouts."""
  lengths = jnp.sum(jnp.logical_not(padding_mask), axis=1).astype(jnp.int32)
  return _adaptive_decoder_forward(inputs, lengths, speaker_encodings,
                                   tuple(layers_params), linear_w, linear_b,
                                   kernel_sizes=tuple(kernel_sizes))


# ---------------------------------------------------------------------------
# Pure-JAX reference reproducing the PyTorch forward.  `mm_dtype` selects the
# matmul-operand precision: float32 == exact PyTorch math, bfloat16 == matches
# the kernels' MXU operand precision (f32 accumulation in both cases).
# ---------------------------------------------------------------------------
def _reference_forward(inputs, padding_mask, speaker_encodings, layers_params,
                       linear_w, linear_b, kernel_sizes, mm_dtype):
  f32 = jnp.float32
  prec = jax.lax.Precision.HIGHEST

  def affine(enc, w, b):             # PyTorch Linear for gamma/beta (f32 exact)
    return jnp.sum(enc[:, :, None] * jnp.transpose(w)[None, :, :], axis=1) + b

  def instance_norm(x, pad):
    keep = jnp.logical_not(pad).astype(f32)[:, :, None]
    length = jnp.sum(keep, axis=1, keepdims=True)
    mean = jnp.sum(x, axis=1, keepdims=True) / length
    var = jnp.sum((x - mean) ** 2, axis=1, keepdims=True) / length
    std = jnp.sqrt(var + EPS)
    normed = (x - mean) / std
    return jnp.where(pad[:, :, None], 0.0, normed)

  def conv1d(h, w, b, ksz):          # torch.nn.Conv1d, padding=ksz//2 (odd ksz)
    half = ksz // 2
    lh = h.shape[1]
    hp = jnp.pad(h, ((0, 0), (half, half), (0, 0)))
    out = b[None, None, :].astype(f32)
    for k in range(ksz):
      out = out + jnp.einsum("bli,oi->blo",
                             hp[:, k:k + lh, :].astype(mm_dtype),
                             w[:, :, k].astype(mm_dtype),
                             preferred_element_type=f32, precision=prec)
    return out

  pad3 = padding_mask[:, :, None]
  decoder_output = inputs
  for i, ksz in enumerate(kernel_sizes):
    p = layers_params[i]
    gamma = affine(speaker_encodings, p["w_gamma"], p["b_gamma"])
    beta = affine(speaker_encodings, p["w_beta"], p["b_beta"])
    normed = instance_norm(inputs, padding_mask)
    scaled = normed * gamma[:, None, :] + beta[:, None, :]
    c = jax.nn.relu(conv1d(scaled, p["conv1_w"], p["conv1_b"], ksz))
    c = conv1d(c, p["conv2_w"], p["conv2_b"], ksz)
    conved = jnp.where(pad3, 0.0, c + scaled)
    decoder_output = jnp.where(pad3, 0.0, conved)
  return jnp.dot(decoder_output.astype(mm_dtype),
                 jnp.transpose(linear_w).astype(mm_dtype),
                 preferred_element_type=f32, precision=prec) + linear_b


if __name__ == "__main__":
  B, L, E, O = 2, 32, 128, 128           # embed_dims = 128, output_dims = 128
  kernel_sizes = (3, 5)

  root = jax.random.PRNGKey(0)
  k_x, k_spk, k_lin_w, k_lin_b, k_layers = jax.random.split(root, 5)

  inputs = jax.random.normal(k_x, (B, L, E), dtype=jnp.float32)
  speaker_encodings = jax.random.normal(k_spk, (B, E), dtype=jnp.float32)
  valid_lengths = jnp.array([L, L - 7], dtype=jnp.int32)
  padding_mask = jnp.arange(L)[None, :] >= valid_lengths[:, None]   # (B, L) bool

  def make_layer_params(key, emb, ksz):
    ks = jax.random.split(key, 8)
    return {
        "w_gamma": 0.02 * jax.random.normal(ks[0], (emb, emb), jnp.float32),
        "b_gamma": 1.0 + 0.05 * jax.random.normal(ks[1], (emb,), jnp.float32),
        "w_beta": 0.02 * jax.random.normal(ks[2], (emb, emb), jnp.float32),
        "b_beta": 0.05 * jax.random.normal(ks[3], (emb,), jnp.float32),
        "conv1_w": 0.05 * jax.random.normal(ks[4], (emb, emb, ksz), jnp.float32),
        "conv1_b": 0.05 * jax.random.normal(ks[5], (emb,), jnp.float32),
        "conv2_w": 0.05 * jax.random.normal(ks[6], (emb, emb, ksz), jnp.float32),
        "conv2_b": 0.05 * jax.random.normal(ks[7], (emb,), jnp.float32),
    }

  layer_keys = jax.random.split(k_layers, len(kernel_sizes))
  layers_params = tuple(make_layer_params(layer_keys[i], E, kernel_sizes[i])
                        for i in range(len(kernel_sizes)))
  linear_w = 0.05 * jax.random.normal(k_lin_w, (O, E), jnp.float32)  # (out, in)
  linear_b = 0.05 * jax.random.normal(k_lin_b, (O,), jnp.float32)

  out = adaptive_decoder(inputs, padding_mask, speaker_encodings, layers_params,
                         linear_w, linear_b, kernel_sizes)
  out = jax.block_until_ready(out)

  # Check 1 (tight): matched precision -- bf16 MXU operands, f32 accumulation.
  ref_bf16 = _reference_forward(inputs, padding_mask, speaker_encodings,
                                layers_params, linear_w, linear_b,
                                kernel_sizes, jnp.bfloat16)
  np.testing.assert_allclose(np.asarray(out), np.asarray(ref_bf16),
                             rtol=5e-3, atol=5e-3)

  # Check 2 (loose): pure-float32 PyTorch math; the only deviation is the
  # standard bf16 rounding of MXU operands inside the kernels.
  ref_f32 = _reference_forward(inputs, padding_mask, speaker_encodings,
                               layers_params, linear_w, linear_b,
                               kernel_sizes, jnp.float32)
  np.testing.assert_allclose(np.asarray(out), np.asarray(ref_f32),
                             rtol=1e-1, atol=1e-1)

  print("KERNEL_OK")
</pallas_src>

<mosaic_0001>
module attributes {stable_mosaic.version = 11 : i64} {
  func.func @_linear_kernel(%arg0: i32, %arg1: memref<64x128xf32, #tpu.memory_space<vmem>>, %arg2: memref<128x128xbf16, #tpu.memory_space<vmem>>, %arg3: memref<1x128xf32, #tpu.memory_space<vmem>>, %arg4: memref<64x128xf32, #tpu.memory_space<vmem>>) attributes {dimension_semantics = [#tpu.dimension_semantics<parallel>], iteration_bounds = array<i64: 1>, scalar_prefetch = 0 : i64, scratch_operands = 0 : i64, tpu.core_type = #tpu.core_type<tc>, window_params = [{transform_indices = @transform_0, window_bounds = array<i64: 64, 128>}, {pipeline_mode = #tpu.pipeline_mode<synchronous>, transform_indices = @transform_1, window_bounds = array<i64: 128, 128>}, {pipeline_mode = #tpu.pipeline_mode<synchronous>, transform_indices = @transform_2, window_bounds = array<i64: 1, 128>}, {transform_indices = @transform_3, window_bounds = array<i64: 64, 128>}]} {
    %c0 = arith.constant 0 : index
    %c0_0 = arith.constant 0 : index
    %0 = vector.load %arg1[%c0, %c0_0] : memref<64x128xf32, #tpu.memory_space<vmem>>, vector<64x128xf32>
    %1 = arith.truncf %0 : vector<64x128xf32> to vector<64x128xbf16>
    %c0_1 = arith.constant 0 : index
    %c0_2 = arith.constant 0 : index
    %2 = vector.load %arg2[%c0_1, %c0_2] : memref<128x128xbf16, #tpu.memory_space<vmem>>, vector<128x128xbf16>
    %cst = arith.constant dense<0.000000e+00> : vector<64x128xf32>
    %3 = tpu.matmul %1, %2, %cst {dimension_numbers = #tpu.dot_dimension_numbers<[1], [0], [0], [1], [0, 0, 1, 1], [], []>} : vector<64x128xbf16>, vector<128x128xbf16>, vector<64x128xf32> -> vector<64x128xf32>
    %c0_3 = arith.constant 0 : index
    %c0_4 = arith.constant 0 : index
    %4 = vector.load %arg3[%c0_3, %c0_4] : memref<1x128xf32, #tpu.memory_space<vmem>>, vector<1x128xf32>
    %5 = vector.broadcast %4 : vector<1x128xf32> to vector<64x128xf32>
    %6 = arith.addf %3, %5 : vector<64x128xf32>
    %c0_5 = arith.constant 0 : index
    %c0_6 = arith.constant 0 : index
    %7 = vector.load %arg4[%c0_5, %c0_6] : memref<64x128xf32, #tpu.memory_space<vmem>>, vector<64x128xf32>
    tpu.vector_store %arg4[%c0_5, %c0_6], %6 {strides = array<i32>} : memref<64x128xf32, #tpu.memory_space<vmem>>, vector<64x128xf32>,
    return
  }
  func.func @transform_0(%arg0: i32) -> (i32, i32) {
    %c0_i32 = arith.constant 0 : i32
    %c0_i32_0 = arith.constant 0 : i32
    return %arg0, %c0_i32 : i32, i32
  }
  func.func @transform_1(%arg0: i32) -> (i32, i32) {
    %c0_i32 = arith.constant 0 : i32
    %c0_i32_0 = arith.constant 0 : i32
    %c0_i32_1 = arith.constant 0 : i32
    return %c0_i32, %c0_i32_0 : i32, i32
  }
  func.func @transform_2(%arg0: i32) -> (i32, i32) {
    %c0_i32 = arith.constant 0 : i32
    %c0_i32_0 = arith.constant 0 : i32
    %c0_i32_1 = arith.constant 0 : i32
    return %c0_i32, %c0_i32_0 : i32, i32
  }
  func.func @transform_3(%arg0: i32) -> (i32, i32) {
    %c0_i32 = arith.constant 0 : i32
    %c0_i32_0 = arith.constant 0 : i32
    return %arg0, %c0_i32 : i32, i32
  }
}

module attributes {stable_mosaic.version = 11 : i64} {
  func.func @_adaptive_decoder_layer_kernel(%arg0: i32, %arg1: memref<2xi32, #tpu.memory_space<smem>>, %arg2: memref<1x32x128xf32, #tpu.memory_space<vmem>>, %arg3: memref<1x128x1xf32, #tpu.memory_space<vmem>>, %arg4: memref<128x128xf32, #tpu.memory_space<vmem>>, %arg5: memref<1x128xf32, #tpu.memory_space<vmem>>, %arg6: memref<128x128xf32, #tpu.memory_space<vmem>>, %arg7: memref<1x128xf32, #tpu.memory_space<vmem>>, %arg8: memref<640x128xbf16, #tpu.memory_space<vmem>>, %arg9: memref<1x128xf32, #tpu.memory_space<vmem>>, %arg10: memref<640x128xbf16, #tpu.memory_space<vmem>>, %arg11: memref<1x128xf32, #tpu.memory_space<vmem>>, %arg12: memref<1x32x128xf32, #tpu.memory_space<vmem>>, %arg13: memref<32x640xf32, #tpu.memory_space<vmem>>) attributes {dimension_semantics = [#tpu.dimension_semantics<parallel>], iteration_bounds = array<i64: 2>, scalar_prefetch = 1 : i64, scratch_operands = 1 : i64, tpu.core_type = #tpu.core_type<tc>, window_params = [{transform_indices = @transform_0, window_bounds = array<i64: 1, 32, 128>}, {transform_indices = @transform_1, window_bounds = array<i64: 1, 128, 1>}, {pipeline_mode = #tpu.pipeline_mode<synchronous>, transform_indices = @transform_2, window_bounds = array<i64: 128, 128>}, {pipeline_mode = #tpu.pipeline_mode<synchronous>, transform_indices = @transform_3, window_bounds = array<i64: 1, 128>}, {pipeline_mode = #tpu.pipeline_mode<synchronous>, transform_indices = @transform_4, window_bounds = array<i64: 128, 128>}, {pipeline_mode = #tpu.pipeline_mode<synchronous>, transform_indices = @transform_5, window_bounds = array<i64: 1, 128>}, {pipeline_mode = #tpu.pipeline_mode<synchronous>, transform_indices = @transform_6, window_bounds = array<i64: 640, 128>}, {pipeline_mode = #tpu.pipeline_mode<synchronous>, transform_indices = @transform_7, window_bounds = array<i64: 1, 128>}, {pipeline_mode = #tpu.pipeline_mode<synchronous>, transform_indices = @transform_8, window_bounds = array<i64: 640, 128>}, {pipeline_mode = #tpu.pipeline_mode<synchronous>, transform_indices = @transform_9, window_bounds = array<i64: 1, 128>}, {transform_indices = @transform_10, window_bounds = array<i64: 1, 32, 128>}]} {
    %c0 = arith.constant 0 : index
    %c0_0 = arith.constant 0 : index
    %c0_1 = arith.constant 0 : index
    %0 = vector.load %arg2[%c0, %c0_0, %c0_1] : memref<1x32x128xf32, #tpu.memory_space<vmem>>, vector<1x32x128xf32>
    %1 = vector.shape_cast %0 : vector<1x32x128xf32> to vector<32x128xf32>
    %2 = arith.index_cast %arg0 : i32 to index
    %3 = memref.load %arg1[%2] : memref<2xi32, #tpu.memory_space<smem>>
    %c1_i32 = arith.constant 1 : i32
    %4 = arith.maxsi %3, %c1_i32 : i32
    %5 = arith.sitofp %4 : i32 to f32
    %6 = tpu.iota {dimensions = array<i32: 0>} : vector<32x1xi32>
    %7 = vector.broadcast %3 : i32 to vector<32x1xi32>
    %8 = arith.cmpi slt, %6, %7 : vector<32x1xi32>
    %9 = arith.extui %8 : vector<32x1xi1> to vector<32x1xi32>
    %10 = arith.sitofp %9 : vector<32x1xi32> to vector<32x1xf32>
    %cst = arith.constant dense<0.000000e+00> : vector<128xf32>
    %11 = vector.multi_reduction <add>, %1, %cst [0] : vector<32x128xf32> to vector<128xf32>
    %12 = vector.shape_cast %11 : vector<128xf32> to vector<1x128xf32>
    %13 = arith.mulf %1, %1 : vector<32x128xf32>
    %cst_2 = arith.constant dense<0.000000e+00> : vector<128xf32>
    %14 = vector.multi_reduction <add>, %13, %cst_2 [0] : vector<32x128xf32> to vector<128xf32>
    %15 = vector.shape_cast %14 : vector<128xf32> to vector<1x128xf32>
    %16 = vector.broadcast %5 : f32 to vector<1x128xf32>
    %17 = arith.divf %12, %16 : vector<1x128xf32>
    %cst_3 = arith.constant 2.000000e+00 : f32
    %18 = vector.broadcast %cst_3 : f32 to vector<1x128xf32>
    %19 = arith.mulf %18, %17 : vector<1x128xf32>
    %20 = arith.mulf %19, %12 : vector<1x128xf32>
    %21 = arith.subf %15, %20 : vector<1x128xf32>
    %22 = arith.mulf %17, %17 : vector<1x128xf32>
    %cst_4 = arith.constant 3.200000e+01 : f32
    %23 = vector.broadcast %cst_4 : f32 to vector<1x128xf32>
    %24 = arith.mulf %23, %22 : vector<1x128xf32>
    %25 = arith.addf %21, %24 : vector<1x128xf32>
    %26 = vector.broadcast %5 : f32 to vector<1x128xf32>
    %27 = arith.divf %25, %26 : vector<1x128xf32>
    %cst_5 = arith.constant 0.000000e+00 : f32
    %28 = vector.broadcast %cst_5 : f32 to vector<1x128xf32>
    %29 = arith.maximumf %27, %28 : vector<1x128xf32>
    %cst_6 = arith.constant 9.99999993E-9 : f32
    %30 = vector.broadcast %cst_6 : f32 to vector<1x128xf32>
    %31 = arith.addf %29, %30 : vector<1x128xf32>
    %32 = math.sqrt %31 : vector<1x128xf32>
    %33 = vector.broadcast %17 : vector<1x128xf32> to vector<32x128xf32>
    %34 = arith.subf %1, %33 : vector<32x128xf32>
    %35 = vector.broadcast %32 : vector<1x128xf32> to vector<32x128xf32>
    %36 = arith.divf %34, %35 : vector<32x128xf32>
    %37 = vector.broadcast %10 : vector<32x1xf32> to vector<32x128xf32>
    %38 = arith.mulf %36, %37 : vector<32x128xf32>
    %c0_7 = arith.constant 0 : index
    %c0_8 = arith.constant 0 : index
    %c0_9 = arith.constant 0 : index
    %39 = vector.load %arg3[%c0_7, %c0_8, %c0_9] : memref<1x128x1xf32, #tpu.memory_space<vmem>>, vector<1x128x1xf32>
    %40 = vector.shape_cast %39 : vector<1x128x1xf32> to vector<128x1xf32>
    %c0_10 = arith.constant 0 : index
    %c0_11 = arith.constant 0 : index
    %41 = vector.load %arg4[%c0_10, %c0_11] : memref<128x128xf32, #tpu.memory_space<vmem>>, vector<128x128xf32>
    %42 = vector.broadcast %40 : vector<128x1xf32> to vector<128x128xf32>
    %43 = arith.mulf %42, %41 : vector<128x128xf32>
    %cst_12 = arith.constant dense<0.000000e+00> : vector<128xf32>
    %44 = vector.multi_reduction <add>, %43, %cst_12 [0] : vector<128x128xf32> to vector<128xf32>
    %45 = vector.shape_cast %44 : vector<128xf32> to vector<1x128xf32>
    %c0_13 = arith.constant 0 : index
    %c0_14 = arith.constant 0 : index
    %46 = vector.load %arg5[%c0_13, %c0_14] : memref<1x128xf32, #tpu.memory_space<vmem>>, vector<1x128xf32>
    %47 = arith.addf %45, %46 : vector<1x128xf32>
    %c0_15 = arith.constant 0 : index
    %c0_16 = arith.constant 0 : index
    %48 = vector.load %arg6[%c0_15, %c0_16] : memref<128x128xf32, #tpu.memory_space<vmem>>, vector<128x128xf32>
    %49 = vector.broadcast %40 : vector<128x1xf32> to vector<128x128xf32>
    %50 = arith.mulf %49, %48 : vector<128x128xf32>
    %cst_17 = arith.constant dense<0.000000e+00> : vector<128xf32>
    %51 = vector.multi_reduction <add>, %50, %cst_17 [0] : vector<128x128xf32> to vector<128xf32>
    %52 = vector.shape_cast %51 : vector<128xf32> to vector<1x128xf32>
    %c0_18 = arith.constant 0 : index
    %c0_19 = arith.constant 0 : index
    %53 = vector.load %arg7[%c0_18, %c0_19] : memref<1x128xf32, #tpu.memory_space<vmem>>, vector<1x128xf32>
    %54 = arith.addf %52, %53 : vector<1x128xf32>
    %55 = vector.broadcast %47 : vector<1x128xf32> to vector<32x128xf32>
    %56 = arith.mulf %38, %55 : vector<32x128xf32>
    %57 = vector.broadcast %54 : vector<1x128xf32> to vector<32x128xf32>
    %58 = arith.addf %56, %57 : vector<32x128xf32>
    %cst_20 = arith.constant 0.000000e+00 : f32
    %59 = vector.broadcast %cst_20 : f32 to vector<2x128xf32>
    %c0_21 = arith.constant 0 : index
    %c0_22 = arith.constant 0 : index
    %60 = vector.load %arg13[%c0_21, %c0_22] : memref<32x640xf32, #tpu.memory_space<vmem>>, vector<2x128xf32>
    tpu.vector_store %arg13[%c0_21, %c0_22], %59 {strides = array<i32>} : memref<32x640xf32, #tpu.memory_space<vmem>>, vector<2x128xf32>,
    %61 = vector.extract_strided_slice %58 {offsets = [0, 0], sizes = [30, 128], strides = [1, 1]} : vector<32x128xf32> to vector<30x128xf32>
    %c2 = arith.constant 2 : index
    %c0_23 = arith.constant 0 : index
    %62 = vector.load %arg13[%c2, %c0_23] : memref<32x640xf32, #tpu.memory_space<vmem>>, vector<30x128xf32>
    tpu.vector_store %arg13[%c2, %c0_23], %61 {strides = array<i32>} : memref<32x640xf32, #tpu.memory_space<vmem>>, vector<30x128xf32>,
    %cst_24 = arith.constant 0.000000e+00 : f32
    %63 = vector.broadcast %cst_24 : f32 to vector<1x128xf32>
    %c0_25 = arith.constant 0 : index
    %c128 = arith.constant 128 : index
    %64 = vector.load %arg13[%c0_25, %c128] : memref<32x640xf32, #tpu.memory_space<vmem>>, vector<1x128xf32>
    tpu.vector_store %arg13[%c0_25, %c128], %63 {strides = array<i32>} : memref<32x640xf32, #tpu.memory_space<vmem>>, vector<1x128xf32>,
    %65 = vector.extract_strided_slice %58 {offsets = [0, 0], sizes = [31, 128], strides = [1, 1]} : vector<32x128xf32> to vector<31x128xf32>
    %c1 = arith.constant 1 : index
    %c128_26 = arith.constant 128 : index
    %66 = vector.load %arg13[%c1, %c128_26] : memref<32x640xf32, #tpu.memory_space<vmem>>, vector<31x128xf32>
    tpu.vector_store %arg13[%c1, %c128_26], %65 {strides = array<i32>} : memref<32x640xf32, #tpu.memory_space<vmem>>, vector<31x128xf32>,
    %c0_27 = arith.constant 0 : index
    %c256 = arith.constant 256 : index
    %67 = vector.load %arg13[%c0_27, %c256] : memref<32x640xf32, #tpu.memory_space<vmem>>, vector<32x128xf32>
    tpu.vector_store %arg13[%c0_27, %c256], %58 {strides = array<i32>} : memref<32x640xf32, #tpu.memory_space<vmem>>, vector<32x128xf32>,
    %68 = vector.extract_strided_slice %58 {offsets = [1, 0], sizes = [31, 128], strides = [1, 1]} : vector<32x128xf32> to vector<31x128xf32>
    %c0_28 = arith.constant 0 : index
    %c384 = arith.constant 384 : index
    %69 = vector.load %arg13[%c0_28, %c384] : memref<32x640xf32, #tpu.memory_space<vmem>>, vector<31x128xf32>
    tpu.vector_store %arg13[%c0_28, %c384], %68 {strides = array<i32>} : memref<32x640xf32, #tpu.memory_space<vmem>>, vector<31x128xf32>,
    %cst_29 = arith.constant 0.000000e+00 : f32
    %70 = vector.broadcast %cst_29 : f32 to vector<1x128xf32>
    %c31 = arith.constant 31 : index
    %c384_30 = arith.constant 384 : index
    %71 = vector.load %arg13[%c31, %c384_30] : memref<32x640xf32, #tpu.memory_space<vmem>>, vector<1x128xf32>
    tpu.vector_store %arg13[%c31, %c384_30], %70 {strides = array<i32>} : memref<32x640xf32, #tpu.memory_space<vmem>>, vector<1x128xf32>,
    %72 = vector.extract_strided_slice %58 {offsets = [2, 0], sizes = [30, 128], strides = [1, 1]} : vector<32x128xf32> to vector<30x128xf32>
    %c0_31 = arith.constant 0 : index
    %c512 = arith.constant 512 : index
    %73 = vector.load %arg13[%c0_31, %c512] : memref<32x640xf32, #tpu.memory_space<vmem>>, vector<30x128xf32>
    tpu.vector_store %arg13[%c0_31, %c512], %72 {strides = array<i32>} : memref<32x640xf32, #tpu.memory_space<vmem>>, vector<30x128xf32>,
    %cst_32 = arith.constant 0.000000e+00 : f32
    %74 = vector.broadcast %cst_32 : f32 to vector<2x128xf32>
    %c30 = arith.constant 30 : index
    %c512_33 = arith.constant 512 : index
    %75 = vector.load %arg13[%c30, %c512_33] : memref<32x640xf32, #tpu.memory_space<vmem>>, vector<2x128xf32>
    tpu.vector_store %arg13[%c30, %c512_33], %74 {strides = array<i32>} : memref<32x640xf32, #tpu.memory_space<vmem>>, vector<2x128xf32>,
    %c0_34 = arith.constant 0 : index
    %c0_35 = arith.constant 0 : index
    %76 = vector.load %arg13[%c0_34, %c0_35] : memref<32x640xf32, #tpu.memory_space<vmem>>, vector<32x640xf32>
    %77 = arith.truncf %76 : vector<32x640xf32> to vector<32x640xbf16>
    %c0_36 = arith.constant 0 : index
    %c0_37 = arith.constant 0 : index
    %78 = vector.load %arg8[%c0_36, %c0_37] : memref<640x128xbf16, #tpu.memory_space<vmem>>, vector<640x128xbf16>
    %cst_38 = arith.constant dense<0.000000e+00> : vector<32x128xf32>
    %79 = tpu.matmul %77, %78, %cst_38 {dimension_numbers = #tpu.dot_dimension_numbers<[1], [0], [0], [1], [0, 0, 1, 1], [], []>} : vector<32x640xbf16>, vector<640x128xbf16>, vector<32x128xf32> -> vector<32x128xf32>
    %c0_39 = arith.constant 0 : index
    %c0_40 = arith.constant 0 : index
    %80 = vector.load %arg9[%c0_39, %c0_40] : memref<1x128xf32, #tpu.memory_space<vmem>>, vector<1x128xf32>
    %81 = vector.broadcast %80 : vector<1x128xf32> to vector<32x128xf32>
    %82 = arith.addf %79, %81 : vector<32x128xf32>
    %cst_41 = arith.constant 0.000000e+00 : f32
    %83 = vector.broadcast %cst_41 : f32 to vector<32x128xf32>
    %84 = arith.maximumf %82, %83 : vector<32x128xf32>
    %cst_42 = arith.constant 0.000000e+00 : f32
    %85 = vector.broadcast %cst_42 : f32 to vector<2x128xf32>
    %c0_43 = arith.constant 0 : index
    %c0_44 = arith.constant 0 : index
    %86 = vector.load %arg13[%c0_43, %c0_44] : memref<32x640xf32, #tpu.memory_space<vmem>>, vector<2x128xf32>
    tpu.vector_store %arg13[%c0_43, %c0_44], %85 {strides = array<i32>} : memref<32x640xf32, #tpu.memory_space<vmem>>, vector<2x128xf32>,
    %87 = vector.extract_strided_slice %84 {offsets = [0, 0], sizes = [30, 128], strides = [1, 1]} : vector<32x128xf32> to vector<30x128xf32>
    %c2_45 = arith.constant 2 : index
    %c0_46 = arith.constant 0 : index
    %88 = vector.load %arg13[%c2_45, %c0_46] : memref<32x640xf32, #tpu.memory_space<vmem>>, vector<30x128xf32>
    tpu.vector_store %arg13[%c2_45, %c0_46], %87 {strides = array<i32>} : memref<32x640xf32, #tpu.memory_space<vmem>>, vector<30x128xf32>,
    %cst_47 = arith.constant 0.000000e+00 : f32
    %89 = vector.broadcast %cst_47 : f32 to vector<1x128xf32>
    %c0_48 = arith.constant 0 : index
    %c128_49 = arith.constant 128 : index
    %90 = vector.load %arg13[%c0_48, %c128_49] : memref<32x640xf32, #tpu.memory_space<vmem>>, vector<1x128xf32>
    tpu.vector_store %arg13[%c0_48, %c128_49], %89 {strides = array<i32>} : memref<32x640xf32, #tpu.memory_space<vmem>>, vector<1x128xf32>,
    %91 = vector.extract_strided_slice %84 {offsets = [0, 0], sizes = [31, 128], strides = [1, 1]} : vector<32x128xf32> to vector<31x128xf32>
    %c1_50 = arith.constant 1 : index
    %c128_51 = arith.constant 128 : index
    %92 = vector.load %arg13[%c1_50, %c128_51] : memref<32x640xf32, #tpu.memory_space<vmem>>, vector<31x128xf32>
    tpu.vector_store %arg13[%c1_50, %c128_51], %91 {strides = array<i32>} : memref<32x640xf32, #tpu.memory_space<vmem>>, vector<31x128xf32>,
    %c0_52 = arith.constant 0 : index
    %c256_53 = arith.constant 256 : index
    %93 = vector.load %arg13[%c0_52, %c256_53] : memref<32x640xf32, #tpu.memory_space<vmem>>, vector<32x128xf32>
    tpu.vector_store %arg13[%c0_52, %c256_53], %84 {strides = array<i32>} : memref<32x640xf32, #tpu.memory_space<vmem>>, vector<32x128xf32>,
    %94 = vector.extract_strided_slice %84 {offsets = [1, 0], sizes = [31, 128], strides = [1, 1]} : vector<32x128xf32> to vector<31x128xf32>
    %c0_54 = arith.constant 0 : index
    %c384_55 = arith.constant 384 : index
    %95 = vector.load %arg13[%c0_54, %c384_55] : memref<32x640xf32, #tpu.memory_space<vmem>>, vector<31x128xf32>
    tpu.vector_store %arg13[%c0_54, %c384_55], %94 {strides = array<i32>} : memref<32x640xf32, #tpu.memory_space<vmem>>, vector<31x128xf32>,
    %cst_56 = arith.constant 0.000000e+00 : f32
    %96 = vector.broadcast %cst_56 : f32 to vector<1x128xf32>
    %c31_57 = arith.constant 31 : index
    %c384_58 = arith.constant 384 : index
    %97 = vector.load %arg13[%c31_57, %c384_58] : memref<32x640xf32, #tpu.memory_space<vmem>>, vector<1x128xf32>
    tpu.vector_store %arg13[%c31_57, %c384_58], %96 {strides = array<i32>} : memref<32x640xf32, #tpu.memory_space<vmem>>, vector<1x128xf32>,
    %98 = vector.extract_strided_slice %84 {offsets = [2, 0], sizes = [30, 128], strides = [1, 1]} : vector<32x128xf32> to vector<30x128xf32>
    %c0_59 = arith.constant 0 : index
    %c512_60 = arith.constant 512 : index
    %99 = vector.load %arg13[%c0_59, %c512_60] : memref<32x640xf32, #tpu.memory_space<vmem>>, vector<30x128xf32>
    tpu.vector_store %arg13[%c0_59, %c512_60], %98 {strides = array<i32>} : memref<32x640xf32, #tpu.memory_space<vmem>>, vector<30x128xf32>,
    %cst_61 = arith.constant 0.000000e+00 : f32
    %100 = vector.broadcast %cst_61 : f32 to vector<2x128xf32>
    %c30_62 = arith.constant 30 : index
    %c512_63 = arith.constant 512 : index
    %101 = vector.load %arg13[%c30_62, %c512_63] : memref<32x640xf32, #tpu.memory_space<vmem>>, vector<2x128xf32>
    tpu.vector_store %arg13[%c30_62, %c512_63], %100 {strides = array<i32>} : memref<32x640xf32, #tpu.memory_space<vmem>>, vector<2x128xf32>,
    %c0_64 = arith.constant 0 : index
    %c0_65 = arith.constant 0 : index
    %102 = vector.load %arg13[%c0_64, %c0_65] : memref<32x640xf32, #tpu.memory_space<vmem>>, vector<32x640xf32>
    %103 = arith.truncf %102 : vector<32x640xf32> to vector<32x640xbf16>
    %c0_66 = arith.constant 0 : index
    %c0_67 = arith.constant 0 : index
    %104 = vector.load %arg10[%c0_66, %c0_67] : memref<640x128xbf16, #tpu.memory_space<vmem>>, vector<640x128xbf16>
    %cst_68 = arith.constant dense<0.000000e+00> : vector<32x128xf32>
    %105 = tpu.matmul %103, %104, %cst_68 {dimension_numbers = #tpu.dot_dimension_numbers<[1], [0], [0], [1], [0, 0, 1, 1], [], []>} : vector<32x640xbf16>, vector<640x128xbf16>, vector<32x128xf32> -> vector<32x128xf32>
    %c0_69 = arith.constant 0 : index
    %c0_70 = arith.constant 0 : index
    %106 = vector.load %arg11[%c0_69, %c0_70] : memref<1x128xf32, #tpu.memory_space<vmem>>, vector<1x128xf32>
    %107 = vector.broadcast %106 : vector<1x128xf32> to vector<32x128xf32>
    %108 = arith.addf %105, %107 : vector<32x128xf32>
    %109 = arith.addf %108, %58 : vector<32x128xf32>
    %110 = vector.broadcast %10 : vector<32x1xf32> to vector<32x128xf32>
    %111 = arith.mulf %109, %110 : vector<32x128xf32>
    %c0_71 = arith.constant 0 : index
    %c0_72 = arith.constant 0 : index
    %c0_73 = arith.constant 0 : index
    %112 = vector.load %arg12[%c0_71, %c0_72, %c0_73] : memref<1x32x128xf32, #tpu.memory_space<vmem>>, vector<1x32x128xf32>
    %113 = vector.shape_cast %112 : vector<1x32x128xf32> to vector<32x128xf32>
    %114 = vector.shape_cast %111 : vector<32x128xf32> to vector<1x32x128xf32>
    tpu.vector_store %arg12[%c0_71, %c0_72, %c0_73], %114 {strides = array<i32>} : memref<1x32x128xf32, #tpu.memory_space<vmem>>, vector<1x32x128xf32>,
    return
  }
  func.func @transform_0(%arg0: i32, %arg1: memref<2xi32, #tpu.memory_space<smem>>) -> (i32, i32, i32) {
    %c0_i32 = arith.constant 0 : i32
    %c0_i32_0 = arith.constant 0 : i32
    %c0_i32_1 = arith.constant 0 : i32
    return %arg0, %c0_i32, %c0_i32_0 : i32, i32, i32
  }
  func.func @transform_1(%arg0: i32, %arg1: memref<2xi32, #tpu.memory_space<smem>>) -> (i32, i32, i32) {
    %c0_i32 = arith.constant 0 : i32
    %c0_i32_0 = arith.constant 0 : i32
    %c0_i32_1 = arith.constant 0 : i32
    return %arg0, %c0_i32, %c0_i32_0 : i32, i32, i32
  }
  func.func @transform_2(%arg0: i32, %arg1: memref<2xi32, #tpu.memory_space<smem>>) -> (i32, i32) {
    %c0_i32 = arith.constant 0 : i32
    %c0_i32_0 = arith.constant 0 : i32
    %c0_i32_1 = arith.constant 0 : i32
    return %c0_i32, %c0_i32_0 : i32, i32
  }
  func.func @transform_3(%arg0: i32, %arg1: memref<2xi32, #tpu.memory_space<smem>>) -> (i32, i32) {
    %c0_i32 = arith.constant 0 : i32
    %c0_i32_0 = arith.constant 0 : i32
    %c0_i32_1 = arith.constant 0 : i32
    return %c0_i32, %c0_i32_0 : i32, i32
  }
  func.func @transform_4(%arg0: i32, %arg1: memref<2xi32, #tpu.memory_space<smem>>) -> (i32, i32) {
    %c0_i32 = arith.constant 0 : i32
    %c0_i32_0 = arith.constant 0 : i32
    %c0_i32_1 = arith.constant 0 : i32
    return %c0_i32, %c0_i32_0 : i32, i32
  }
  func.func @transform_5(%arg0: i32, %arg1: memref<2xi32, #tpu.memory_space<smem>>) -> (i32, i32) {
    %c0_i32 = arith.constant 0 : i32
    %c0_i32_0 = arith.constant 0 : i32
    %c0_i32_1 = arith.constant 0 : i32
    return %c0_i32, %c0_i32_0 : i32, i32
  }
  func.func @transform_6(%arg0: i32, %arg1: memref<2xi32, #tpu.memory_space<smem>>) -> (i32, i32) {
    %c0_i32 = arith.constant 0 : i32
    %c0_i32_0 = arith.constant 0 : i32
    %c0_i32_1 = arith.constant 0 : i32
    return %c0_i32, %c0_i32_0 : i32, i32
  }
  func.func @transform_7(%arg0: i32, %arg1: memref<2xi32, #tpu.memory_space<smem>>) -> (i32, i32) {
    %c0_i32 = arith.constant 0 : i32
    %c0_i32_0 = arith.constant 0 : i32
    %c0_i32_1 = arith.constant 0 : i32
    return %c0_i32, %c0_i32_0 : i32, i32
  }
  func.func @transform_8(%arg0: i32, %arg1: memref<2xi32, #tpu.memory_space<smem>>) -> (i32, i32) {
    %c0_i32 = arith.constant 0 : i32
    %c0_i32_0 = arith.constant 0 : i32
    %c0_i32_1 = arith.constant 0 : i32
    return %c0_i32, %c0_i32_0 : i32, i32
  }
  func.func @transform_9(%arg0: i32, %arg1: memref<2xi32, #tpu.memory_space<smem>>) -> (i32, i32) {
    %c0_i32 = arith.constant 0 : i32
    %c0_i32_0 = arith.constant 0 : i32
    %c0_i32_1 = arith.constant 0 : i32
    return %c0_i32, %c0_i32_0 : i32, i32
  }
  func.func @transform_10(%arg0: i32, %arg1: memref<2xi32, #tpu.memory_space<smem>>) -> (i32, i32, i32) {
    %c0_i32 = arith.constant 0 : i32
    %c0_i32_0 = arith.constant 0 : i32
    %c0_i32_1 = arith.constant 0 : i32
    return %arg0, %c0_i32, %c0_i32_0 : i32, i32, i32
  }
}

</mosaic_0001>

<llo_original>
// kernel: _adaptive_decoder_forward.3
$region0: #{_adaptive_decoder_forward.3}
  #allocation0 [shape = 'u32[]', space=smem, size = 0x4, offset = 0x4, fixed_abs, tag = 'smem constant byte address 0x4 - core index']
  #allocation1 [shape = 'u32[144,128]{1,0:T(1,128)}', space=vmem, size = 0x12000, scoped, tag = 'internal scratch']
  %s0 = inlined_call_operand.vmem [shape: f32[64,128], index: 0, kind: input, shape index: {}]
  %s1 = inlined_call_operand.vmem [shape: bf16[128,128], index: 1, kind: input, shape index: {}]
  %s2 = inlined_call_operand.vmem [shape: f32[1,128], index: 2, kind: input, shape index: {}]
  %s3 = inlined_call_operand.hbm [shape: f32[64,128], index: 3, kind: output, shape index: {}]
  %s4 = sld [smem:[#allocation0]]
  $region22: #{_adaptive_decoder_forward.3} parent=0
    _
  %s6 = ssub.s32 1, %s4
  %s7 = scalar_select 0, %s6, %s4
  $region1: #{_adaptive_decoder_forward.3} parent=0
    #allocation2 [shape = 'u8[32768]{0}', space=vmem, size = 0x8000, scoped, tag = 'output window, operand 0, single buffered']
    #allocation3 [shape = 's32[1]{0}', space=sflag, size = 0x4, scoped, tag = 'scoped memory for _adaptive_decoder_forward.3']
    %8 = vsyncpa [#allocation3], 0
    // Predicated region
    $region2: #{_adaptive_decoder_forward.3} parent=1 // pred_check
      _
    $region3: #{_adaptive_decoder_forward.3} parent=1 // pred_check_branch
      %10 = sbr.rel (0) target = $region5
    $region4: #{_adaptive_decoder_forward.3} parent=1 // pred_region
      _
    $region5: #{_adaptive_decoder_forward.3} parent=1 // pred_fallthru
      _
    // Predicated region
    $region6: #{_adaptive_decoder_forward.3} parent=1 // pred_check
      _
    $region7: #{_adaptive_decoder_forward.3} parent=1 // pred_check_branch
      %12 = sbr.rel (0) target = $region9
    $region8: #{_adaptive_decoder_forward.3} parent=1 // pred_region
      _
    $region9: #{_adaptive_decoder_forward.3} parent=1 // pred_fallthru
      _
    // Predicated region
    $region10: #{_adaptive_decoder_forward.3} parent=1 // pred_check
      _
    $region11: #{_adaptive_decoder_forward.3} parent=1 // pred_check_branch
      %14 = sbr.rel (0) target = $region13
    $region12: #{_adaptive_decoder_forward.3} parent=1 // pred_region
      _
    $region13: #{_adaptive_decoder_forward.3} parent=1 // pred_fallthru
      _
    %v16 = vld [vmem:[%s0] sm:$0xff]
    %v17 = vld [vmem:[%s0 + $0x8] sm:$0xff]
    %v18 = vld [vmem:[%s0 + $0x10] sm:$0xff]
    %v19 = vld [vmem:[%s0 + $0x18] sm:$0xff]
    %v20 = vld [vmem:[%s0 + $0x20] sm:$0xff]
    %v21 = vld [vmem:[%s0 + $0x28] sm:$0xff]
    %v22 = vld [vmem:[%s0 + $0x30] sm:$0xff]
    %v23 = vld [vmem:[%s0 + $0x38] sm:$0xff]
    %v24 = vpack.c.bf16 %v17, %v16
    %v25 = vpack.c.bf16 %v19, %v18
    %v26 = vpack.c.bf16 %v21, %v20
    %v27 = vpack.c.bf16 %v23, %v22
    %v28 = vld [vmem:[%s1] sm:$0xf]
    %v29 = vld [vmem:[%s1 + $0x4] sm:$0xf]
    %v30 = vld [vmem:[%s1 + $0x8] sm:$0xf]
    %v31 = vld [vmem:[%s1 + $0xc] sm:$0xf]
    %v32 = vld [vmem:[%s1 + $0x10] sm:$0xf]
    %v33 = vld [vmem:[%s1 + $0x14] sm:$0xf]
    %v34 = vld [vmem:[%s1 + $0x18] sm:$0xf]
    %v35 = vld [vmem:[%s1 + $0x1c] sm:$0xf]
    %v36 = vld [vmem:[%s1 + $0x20] sm:$0xf]
    %v37 = vld [vmem:[%s1 + $0x24] sm:$0xf]
    %v38 = vld [vmem:[%s1 + $0x28] sm:$0xf]
    %v39 = vld [vmem:[%s1 + $0x2c] sm:$0xf]
    %v40 = vld [vmem:[%s1 + $0x30] sm:$0xf]
    %v41 = vld [vmem:[%s1 + $0x34] sm:$0xf]
    %v42 = vld [vmem:[%s1 + $0x38] sm:$0xf]
    %v43 = vld [vmem:[%s1 + $0x3c] sm:$0xf]
    %v44 = vld [vmem:[%s2] sm:$0x1]
    %v46 = vlaneseq
    %v47 = vshrl.u32 %v46, 7
    %v48 = vsub.s32 0, %v47
    %v49 = vrot.slane %v44, %v48
    %v67 = vunpack.c.l.b16 %v28
    %v68 = vunpack.c.l.b16 %v29
    %v69 = vunpack.c.l.b16 %v30
    %v70 = vunpack.c.l.b16 %v31
    %v71 = vunpack.c.l.b16 %v32
    %v72 = vunpack.c.l.b16 %v33
    %v73 = vunpack.c.l.b16 %v34
    %v74 = vunpack.c.l.b16 %v35
    %v75 = vunpack.c.l.b16 %v36
    %v76 = vunpack.c.l.b16 %v37
    %v77 = vunpack.c.l.b16 %v38
    %v78 = vunpack.c.l.b16 %v39
    %v79 = vunpack.c.l.b16 %v40
    %v80 = vunpack.c.l.b16 %v41
    %v81 = vunpack.c.l.b16 %v42
    %v82 = vunpack.c.l.b16 %v43
    %v83 = vpack.c.b16 %v68, %v67
    %v84 = vpack.c.b16 %v70, %v69
    %v85 = vpack.c.b16 %v72, %v71
    %v86 = vpack.c.b16 %v74, %v73
    %v87 = vpack.c.b16 %v76, %v75
    %v88 = vpack.c.b16 %v78, %v77
    %v89 = vpack.c.b16 %v80, %v79
    %v90 = vpack.c.b16 %v82, %v81
    %99 = vmatprep.subr.bf16.mxu0 0
    %100 = vmatpush1.bf16.msra.mxu0 %v83
    %101 = vmatprep.subr.bf16.mxu0 0
    %102 = vmatpush1.bf16.msra.mxu0 %v84
    %103 = vmatprep.subr.bf16.mxu0 0
    %104 = vmatpush1.bf16.msra.mxu0 %v85
    %105 = vmatprep.subr.bf16.mxu0 0
    %106 = vmatpush1.bf16.msra.mxu0 %v86
    %107 = vmatprep.subr.bf16.mxu0 0
    %108 = vmatpush1.bf16.msra.mxu0 %v87
    %109 = vmatprep.subr.bf16.mxu0 0
    %110 = vmatpush1.bf16.msra.mxu0 %v88
    %111 = vmatprep.subr.bf16.mxu0 0
    %112 = vmatpush1.bf16.msra.mxu0 %v89
    %113 = vmatprep.subr.bf16.mxu0 0
    %114 = vmatpush1.bf16.msra.mxu0 %v90
    %115 = vmatprep.subr.bf16.mxu0 0
    %116 = vmatpush1.bf16.msra.mxu0 0
    %117 = vmatprep.subr.bf16.mxu0 0
    %118 = vmatpush1.bf16.msra.mxu0 0
    %119 = vmatprep.subr.bf16.mxu0 0
    %120 = vmatpush1.bf16.msra.mxu0 0
    %121 = vmatprep.subr.bf16.mxu0 0
    %122 = vmatpush1.bf16.msra.mxu0 0
    %123 = vmatprep.subr.bf16.mxu0 0
    %124 = vmatpush1.bf16.msra.mxu0 0
    %125 = vmatprep.subr.bf16.mxu0 0
    %126 = vmatpush1.bf16.msra.mxu0 0
    %127 = vmatprep.subr.bf16.mxu0 0
    %128 = vmatpush1.bf16.msra.mxu0 0
    %129 = vmatprep.subr.bf16.mxu0 0
    %130 = vmatpush1.bf16.msra.mxu0 0
    %131 = vmatprep.mubr.bf16.mxu0 0
    %132 = vmatmul.mubr.bf16.gmra.mrb[0].mxu0 %v24
    %v133 = vpop.f32.mrb[0].mxu0
    %v134 = vadd.f32 %v49, %v133
    %v135 = vpop.f32.mrb[0].mxu0
    %v136 = vpop.f32.mrb[0].mxu0
    %v137 = vadd.f32 %v49, %v136
    %v138 = vpop.f32.mrb[0].mxu0
    %139 = vmatprep.mubr.bf16.mxu0 0
    %140 = vmatmul.mubr.bf16.gmra.mrb[0].mxu0 %v25
    %v141 = vpop.f32.mrb[0].mxu0
    %v142 = vadd.f32 %v49, %v141
    %v143 = vpop.f32.mrb[0].mxu0
    %v144 = vpop.f32.mrb[0].mxu0
    %v145 = vadd.f32 %v49, %v144
    %v146 = vpop.f32.mrb[0].mxu0
    %147 = vmatprep.mubr.bf16.mxu0 0
    %148 = vmatmul.mubr.bf16.gmra.mrb[0].mxu0 %v26
    %v149 = vpop.f32.mrb[0].mxu0
    %v150 = vadd.f32 %v49, %v149
    %v151 = vpop.f32.mrb[0].mxu0
    %v152 = vpop.f32.mrb[0].mxu0
    %v153 = vadd.f32 %v49, %v152
    %v154 = vpop.f32.mrb[0].mxu0
    %155 = vmatprep.mubr.bf16.mxu0 0
    %156 = vmatmul.mubr.bf16.gmra.mrb[0].mxu0 %v27
    %v157 = vpop.f32.mrb[0].mxu0
    %v158 = vadd.f32 %v49, %v157
    %v159 = vpop.f32.mrb[0].mxu0
    %v160 = vpop.f32.mrb[0].mxu0
    %v161 = vadd.f32 %v49, %v160
    %v162 = vpop.f32.mrb[0].mxu0
    %163 = vdwg.mxu0
    %164 = vst [vmem:[#allocation2] sm:$0xff] %v134
    %165 = vst [vmem:[#allocation2 + $0x8] sm:$0xff] %v137
    %166 = vst [vmem:[#allocation2 + $0x10] sm:$0xff] %v142
    %167 = vst [vmem:[#allocation2 + $0x18] sm:$0xff] %v145
    %168 = vst [vmem:[#allocation2 + $0x20] sm:$0xff] %v150
    %169 = vst [vmem:[#allocation2 + $0x28] sm:$0xff] %v153
    %170 = vst [vmem:[#allocation2 + $0x30] sm:$0xff] %v158
    %171 = vst [vmem:[#allocation2 + $0x38] sm:$0xff] %v161
    // Predicated region
    $region14: #{_adaptive_decoder_forward.3} parent=1 // pred_check
      _
    $region15: #{_adaptive_decoder_forward.3} parent=1 // pred_check_branch
      %173 = sbr.rel (0) target = $region17
    $region16: #{_adaptive_decoder_forward.3} parent=1 // pred_region
      %s175 = ssub.s32 1024, 1024
      %176 = vsyncadd [#allocation3], %s175
      %s177 = sshll.u32 [#allocation2], 4
      %s178 = int_to_ptr.vmem [resolvable:$true] %s177
      %183 = dma.vmem_to_hbm [thread:$0]  %s178, 1024, %s3, [#allocation3], 128, 128, 8
    $region17: #{_adaptive_decoder_forward.3} parent=1 // pred_fallthru
      _
    // Predicated region
    $region18: #{_adaptive_decoder_forward.3} parent=1 // pred_check
      _
    $region19: #{_adaptive_decoder_forward.3} parent=1 // pred_check_branch
      %185 = sbr.rel (0) target = $region21
    $region20: #{_adaptive_decoder_forward.3} parent=1 // pred_region
      %186 = dma.done [#allocation3], 1024
    $region21: #{_adaptive_decoder_forward.3} parent=1 // pred_fallthru
      _
    %187 = vsyncpa [#allocation3], 1

// kernel: _adaptive_decoder_forward.2
$region0: #{_adaptive_decoder_forward.2}
  #allocation0 [shape = 'u32[]', space=smem, size = 0x4, offset = 0x4, fixed_abs, tag = 'smem constant byte address 0x4 - core index']
  #allocation1 [shape = 'u32[144,128]{1,0:T(1,128)}', space=vmem, size = 0x12000, scoped, tag = 'internal scratch']
  #allocation2 [shape = 'f32[32,640]{1,0:T(8,128)}', space=vmem, size = 0x14000, scoped, tag = 'scratch operand']
  #allocation3 [shape = 's32[1]{0}', space=sflag, size = 0x4, scoped, tag = 'scoped memory for _adaptive_decoder_forward.2']
  #allocation4 [shape = 'u8[512]{0}', space=smem, size = 0x200, scoped, tag = 'prefetched SMEM operand 0']
  %s0 = inlined_call_operand.vmem [shape: s32[2], index: 0, kind: input, shape index: {}]
  %s1 = inlined_call_operand.vmem [shape: f32[2,32,128], index: 1, kind: input, shape index: {}]
  %s2 = inlined_call_operand.vmem [shape: f32[2,128,1], index: 2, kind: input, shape index: {}]
  %s3 = inlined_call_operand.vmem [shape: f32[128,128], index: 3, kind: input, shape index: {}]
  %s4 = inlined_call_operand.vmem [shape: f32[1,128], index: 4, kind: input, shape index: {}]
  %s5 = inlined_call_operand.vmem [shape: f32[128,128], index: 5, kind: input, shape index: {}]
  %s6 = inlined_call_operand.vmem [shape: f32[1,128], index: 6, kind: input, shape index: {}]
  %s7 = inlined_call_operand.vmem [shape: bf16[640,128], index: 7, kind: input, shape index: {}]
  %s8 = inlined_call_operand.vmem [shape: f32[1,128], index: 8, kind: input, shape index: {}]
  %s9 = inlined_call_operand.vmem [shape: bf16[640,128], index: 9, kind: input, shape index: {}]
  %s10 = inlined_call_operand.vmem [shape: f32[1,128], index: 10, kind: input, shape index: {}]
  %s11 = inlined_call_operand.vmem [shape: f32[2,32,128], index: 11, kind: output, shape index: {}]
  %s12 = sld [smem:[#allocation0]]
  $region73: #{_adaptive_decoder_forward.2} parent=0
    _
  %s14 = ssub.s32 1, %s12
  %s15 = scalar_select 0, %s14, %s12
  %s16 = sshll.u32 %s0, 4
  %s17 = int_to_ptr.vmem [resolvable:$true] %s16
  %19 = dma.vmem_to_smem %s17, 16, [#allocation4], [#allocation3]
  %20 = dma.done [#allocation3], 16
  %21 = sfence
  loop: start=0, step=1, limit=4
  $region2: #{_adaptive_decoder_forward.2} parent=0 // loop_pre_header
    _
  $region3: #{_adaptive_decoder_forward.2} parent=0 // loop_header
    %s23 = sphi 0, %s27
    %p24 = scmp.ge.s32.totalorder %s23, 4
    %s33 = sphi 0, %s35
    %s36 = sphi 0, %s33
    %s37 = sphi 0, %s36
    %s53 = sphi 0, %s37
    %s59 = sphi 0, %s61
    %s62 = sphi 0, %s59
    %s63 = sphi 0, %s62
    %s79 = sphi 0, %s63
    %s83 = sphi 0, %s83
    %s85 = sphi 0, %s83
    %s86 = sphi 0, %s85
    %s100 = sphi 0, %s86
    %s104 = sphi 0, %s104
    %s106 = sphi 0, %s104
    %s107 = sphi 0, %s106
    %s121 = sphi 0, %s107
    %s125 = sphi 0, %s125
    %s127 = sphi 0, %s125
    %s128 = sphi 0, %s127
    %s142 = sphi 0, %s128
    %s146 = sphi 0, %s146
    %s148 = sphi 0, %s146
    %s149 = sphi 0, %s148
    %s163 = sphi 0, %s149
    %s167 = sphi 0, %s167
    %s169 = sphi 0, %s167
    %s170 = sphi 0, %s169
    %s184 = sphi 0, %s170
    %s188 = sphi 0, %s188
    %s190 = sphi 0, %s188
    %s191 = sphi 0, %s190
    %s205 = sphi 0, %s191
    %s209 = sphi 0, %s209
    %s211 = sphi 0, %s209
    %s212 = sphi 0, %s211
    %s226 = sphi 0, %s212
    %s230 = sphi 0, %s230
    %s232 = sphi 0, %s230
    %s233 = sphi 0, %s232
    %s247 = sphi 0, %s233
    %s253 = sphi 0, %s255
    %s256 = sphi 0, %s253
    %s257 = sphi 0, %s256
    %s273 = sphi 0, %s257
  $region4: #{_adaptive_decoder_forward.2} parent=0 // loop_header_branch
    %26 = sbr.rel (%p24) target = $region8
  $region5: #{_adaptive_decoder_forward.2} parent=0 // loop_body
    %s28 = ssub.s32 %s23, 1
    %s29 = ssub.s32 %s23, 2
    %s30 = sadd.s32 %s23, 1
    %s31 = ssub.s32 %s23, %s30
    %p32 = scmp.eq.s32.totalorder %s31, 0
    %s34 = sadd.s32 %s33, 1
    %s35 = scalar_select %p32, %s33, %s34
    %p38 = pneg %p32
    %p39 = scmp.eq.s32.totalorder %s23, 1
    %p40 = por %p38, %p39
    %p41 = scmp.ne.s32.totalorder %s33, %s36
    %p42 = scmp.eq.s32.totalorder %s23, 0
    %p43 = por %p41, %p42
    %p44 = scmp.ne.s32.totalorder %s33, %s36
    %p45 = scmp.eq.s32.totalorder %s28, 1
    %p46 = por %p44, %p45
    %p47 = scmp.ne.s32.totalorder %s36, %s37
    %p48 = scmp.eq.s32.totalorder %s28, 0
    %p49 = por %p47, %p48
    %p50 = scmp.ne.s32.totalorder %s36, %s37
    %p51 = scmp.eq.s32.totalorder %s29, 1
    %p52 = por %p50, %p51
    %p54 = scmp.ne.s32.totalorder %s37, %s53
    %p55 = scmp.eq.s32.totalorder %s29, 0
    %p56 = por %p54, %p55
    %s57 = ssub.s32 %s23, %s30
    %p58 = scmp.eq.s32.totalorder %s57, 0
    %s60 = sadd.s32 %s59, 1
    %s61 = scalar_select %p58, %s59, %s60
    %p64 = pneg %p58
    %p65 = scmp.eq.s32.totalorder %s23, 1
    %p66 = por %p64, %p65
    %p67 = scmp.ne.s32.totalorder %s59, %s62
    %p68 = scmp.eq.s32.totalorder %s23, 0
    %p69 = por %p67, %p68
    %p70 = scmp.ne.s32.totalorder %s59, %s62
    %p71 = scmp.eq.s32.totalorder %s28, 1
    %p72 = por %p70, %p71
    %p73 = scmp.ne.s32.totalorder %s62, %s63
    %p74 = scmp.eq.s32.totalorder %s28, 0
    %p75 = por %p73, %p74
    %p76 = scmp.ne.s32.totalorder %s62, %s63
    %p77 = scmp.eq.s32.totalorder %s29, 1
    %p78 = por %p76, %p77
    %p80 = scmp.ne.s32.totalorder %s63, %s79
    %p81 = scmp.eq.s32.totalorder %s29, 0
    %p82 = por %p80, %p81
    %s84 = sadd.s32 %s83, 1
    %p87 = scmp.eq.s32.totalorder %s23, 1
    %p88 = scmp.ne.s32.totalorder %s83, %s85
    %p89 = scmp.eq.s32.totalorder %s23, 0
    %p90 = por %p88, %p89
    %p91 = scmp.ne.s32.totalorder %s83, %s85
    %p92 = scmp.eq.s32.totalorder %s28, 1
    %p93 = por %p91, %p92
    %p94 = scmp.ne.s32.totalorder %s85, %s86
    %p95 = scmp.eq.s32.totalorder %s28, 0
    %p96 = por %p94, %p95
    %p97 = scmp.ne.s32.totalorder %s85, %s86
    %p98 = scmp.eq.s32.totalorder %s29, 1
    %p99 = por %p97, %p98
    %p101 = scmp.ne.s32.totalorder %s86, %s100
    %p102 = scmp.eq.s32.totalorder %s29, 0
    %p103 = por %p101, %p102
    %s105 = sadd.s32 %s104, 1
    %p108 = scmp.eq.s32.totalorder %s23, 1
    %p109 = scmp.ne.s32.totalorder %s104, %s106
    %p110 = scmp.eq.s32.totalorder %s23, 0
    %p111 = por %p109, %p110
    %p112 = scmp.ne.s32.totalorder %s104, %s106
    %p113 = scmp.eq.s32.totalorder %s28, 1
    %p114 = por %p112, %p113
    %p115 = scmp.ne.s32.totalorder %s106, %s107
    %p116 = scmp.eq.s32.totalorder %s28, 0
    %p117 = por %p115, %p116
    %p118 = scmp.ne.s32.totalorder %s106, %s107
    %p119 = scmp.eq.s32.totalorder %s29, 1
    %p120 = por %p118, %p119
    %p122 = scmp.ne.s32.totalorder %s107, %s121
    %p123 = scmp.eq.s32.totalorder %s29, 0
    %p124 = por %p122, %p123
    %s126 = sadd.s32 %s125, 1
    %p129 = scmp.eq.s32.totalorder %s23, 1
    %p130 = scmp.ne.s32.totalorder %s125, %s127
    %p131 = scmp.eq.s32.totalorder %s23, 0
    %p132 = por %p130, %p131
    %p133 = scmp.ne.s32.totalorder %s125, %s127
    %p134 = scmp.eq.s32.totalorder %s28, 1
    %p135 = por %p133, %p134
    %p136 = scmp.ne.s32.totalorder %s127, %s128
    %p137 = scmp.eq.s32.totalorder %s28, 0
    %p138 = por %p136, %p137
    %p139 = scmp.ne.s32.totalorder %s127, %s128
    %p140 = scmp.eq.s32.totalorder %s29, 1
    %p141 = por %p139, %p140
    %p143 = scmp.ne.s32.totalorder %s128, %s142
    %p144 = scmp.eq.s32.totalorder %s29, 0
    %p145 = por %p143, %p144
    %s147 = sadd.s32 %s146, 1
    %p150 = scmp.eq.s32.totalorder %s23, 1
    %p151 = scmp.ne.s32.totalorder %s146, %s148
    %p152 = scmp.eq.s32.totalorder %s23, 0
    %p153 = por %p151, %p152
    %p154 = scmp.ne.s32.totalorder %s146, %s148
    %p155 = scmp.eq.s32.totalorder %s28, 1
    %p156 = por %p154, %p155
    %p157 = scmp.ne.s32.totalorder %s148, %s149
    %p158 = scmp.eq.s32.totalorder %s28, 0
    %p159 = por %p157, %p158
    %p160 = scmp.ne.s32.totalorder %s148, %s149
    %p161 = scmp.eq.s32.totalorder %s29, 1
    %p162 = por %p160, %p161
    %p164 = scmp.ne.s32.totalorder %s149, %s163
    %p165 = scmp.eq.s32.totalorder %s29, 0
    %p166 = por %p164, %p165
    %s168 = sadd.s32 %s167, 1
    %p171 = scmp.eq.s32.totalorder %s23, 1
    %p172 = scmp.ne.s32.totalorder %s167, %s169
    %p173 = scmp.eq.s32.totalorder %s23, 0
    %p174 = por %p172, %p173
    %p175 = scmp.ne.s32.totalorder %s167, %s169
    %p176 = scmp.eq.s32.totalorder %s28, 1
    %p177 = por %p175, %p176
    %p178 = scmp.ne.s32.totalorder %s169, %s170
    %p179 = scmp.eq.s32.totalorder %s28, 0
    %p180 = por %p178, %p179
    %p181 = scmp.ne.s32.totalorder %s169, %s170
    %p182 = scmp.eq.s32.totalorder %s29, 1
    %p183 = por %p181, %p182
    %p185 = scmp.ne.s32.totalorder %s170, %s184
    %p186 = scmp.eq.s32.totalorder %s29, 0
    %p187 = por %p185, %p186
    %s189 = sadd.s32 %s188, 1
    %p192 = scmp.eq.s32.totalorder %s23, 1
    %p193 = scmp.ne.s32.totalorder %s188, %s190
    %p194 = scmp.eq.s32.totalorder %s23, 0
    %p195 = por %p193, %p194
    %p196 = scmp.ne.s32.totalorder %s188, %s190
    %p197 = scmp.eq.s32.totalorder %s28, 1
    %p198 = por %p196, %p197
    %p199 = scmp.ne.s32.totalorder %s190, %s191
    %p200 = scmp.eq.s32.totalorder %s28, 0
    %p201 = por %p199, %p200
    %p202 = scmp.ne.s32.totalorder %s190, %s191
    %p203 = scmp.eq.s32.totalorder %s29, 1
    %p204 = por %p202, %p203
    %p206 = scmp.ne.s32.totalorder %s191, %s205
    %p207 = scmp.eq.s32.totalorder %s29, 0
    %p208 = por %p206, %p207
    %s210 = sadd.s32 %s209, 1
    %p213 = scmp.eq.s32.totalorder %s23, 1
    %p214 = scmp.ne.s32.totalorder %s209, %s211
    %p215 = scmp.eq.s32.totalorder %s23, 0
    %p216 = por %p214, %p215
    %p217 = scmp.ne.s32.totalorder %s209, %s211
    %p218 = scmp.eq.s32.totalorder %s28, 1
    %p219 = por %p217, %p218
    %p220 = scmp.ne.s32.totalorder %s211, %s212
    %p221 = scmp.eq.s32.totalorder %s28, 0
    %p222 = por %p220, %p221
    %p223 = scmp.ne.s32.totalorder %s211, %s212
    %p224 = scmp.eq.s32.totalorder %s29, 1
    %p225 = por %p223, %p224
    %p227 = scmp.ne.s32.totalorder %s212, %s226
    %p228 = scmp.eq.s32.totalorder %s29, 0
    %p229 = por %p227, %p228
    %s231 = sadd.s32 %s230, 1
    %p234 = scmp.eq.s32.totalorder %s23, 1
    %p235 = scmp.ne.s32.totalorder %s230, %s232
    %p236 = scmp.eq.s32.totalorder %s23, 0
    %p237 = por %p235, %p236
    %p238 = scmp.ne.s32.totalorder %s230, %s232
    %p239 = scmp.eq.s32.totalorder %s28, 1
    %p240 = por %p238, %p239
    %p241 = scmp.ne.s32.totalorder %s232, %s233
    %p242 = scmp.eq.s32.totalorder %s28, 0
    %p243 = por %p241, %p242
    %p244 = scmp.ne.s32.totalorder %s232, %s233
    %p245 = scmp.eq.s32.totalorder %s29, 1
    %p246 = por %p244, %p245
    %p248 = scmp.ne.s32.totalorder %s233, %s247
    %p249 = scmp.eq.s32.totalorder %s29, 0
    %p250 = por %p248, %p249
    %s251 = ssub.s32 %s23, %s30
    %p252 = scmp.eq.s32.totalorder %s251, 0
    %s254 = sadd.s32 %s253, 1
    %s255 = scalar_select %p252, %s253, %s254
    %p258 = pneg %p252
    %p259 = scmp.eq.s32.totalorder %s23, 1
    %p260 = por %p258, %p259
    %p261 = scmp.ne.s32.totalorder %s253, %s256
    %p262 = scmp.eq.s32.totalorder %s23, 0
    %p263 = por %p261, %p262
    %p264 = scmp.ne.s32.totalorder %s253, %s256
    %p265 = scmp.eq.s32.totalorder %s28, 1
    %p266 = por %p264, %p265
    %p267 = scmp.ne.s32.totalorder %s256, %s257
    %p268 = scmp.eq.s32.totalorder %s28, 0
    %p269 = por %p267, %p268
    %p270 = scmp.ne.s32.totalorder %s256, %s257
    %p271 = scmp.eq.s32.totalorder %s29, 1
    %p272 = por %p270, %p271
    %p274 = scmp.ne.s32.totalorder %s257, %s273
    %p275 = scmp.eq.s32.totalorder %s29, 0
    %p276 = por %p274, %p275
    %p277 = scmp.le.s32.totalorder 1, %s23
    %p278 = scmp.lt.s32.totalorder %s23, 3
    %p279 = pnand %p277, %p278
    %p280 = pneg %p279
    // Predicated region
    $region9: #{_adaptive_decoder_forward.2} parent=5 // pred_check
      _
    $region10: #{_adaptive_decoder_forward.2} parent=5 // pred_check_branch
      %282 = sbr.rel (%p279) target = $region12
    $region11: #{_adaptive_decoder_forward.2} parent=5 // pred_region
      %s283 = ssub.s32 %s23, 1
      // Predicated region
      $region13: #{_adaptive_decoder_forward.2} parent=11 // pred_check
        %p284 = pneg %p96
      $region14: #{_adaptive_decoder_forward.2} parent=11 // pred_check_branch
        %286 = sbr.rel (%p284) target = $region16
      $region15: #{_adaptive_decoder_forward.2} parent=11 // pred_region
        _
      $region16: #{_adaptive_decoder_forward.2} parent=11 // pred_fallthru
        _
      // Predicated region
      $region17: #{_adaptive_decoder_forward.2} parent=11 // pred_check
        %p287 = pneg %p117
      $region18: #{_adaptive_decoder_forward.2} parent=11 // pred_check_branch
        %289 = sbr.rel (%p287) target = $region20
      $region19: #{_adaptive_decoder_forward.2} parent=11 // pred_region
        _
      $region20: #{_adaptive_decoder_forward.2} parent=11 // pred_fallthru
        _
      // Predicated region
      $region21: #{_adaptive_decoder_forward.2} parent=11 // pred_check
        %p290 = pneg %p138
      $region22: #{_adaptive_decoder_forward.2} parent=11 // pred_check_branch
        %292 = sbr.rel (%p290) target = $region24
      $region23: #{_adaptive_decoder_forward.2} parent=11 // pred_region
        _
      $region24: #{_adaptive_decoder_forward.2} parent=11 // pred_fallthru
        _
      // Predicated region
      $region25: #{_adaptive_decoder_forward.2} parent=11 // pred_check
        %p293 = pneg %p159
      $region26: #{_adaptive_decoder_forward.2} parent=11 // pred_check_branch
        %295 = sbr.rel (%p293) target = $region28
      $region27: #{_adaptive_decoder_forward.2} parent=11 // pred_region
        _
      $region28: #{_adaptive_decoder_forward.2} parent=11 // pred_fallthru
        _
      // Predicated region
      $region29: #{_adaptive_decoder_forward.2} parent=11 // pred_check
        %p296 = pneg %p180
      $region30: #{_adaptive_decoder_forward.2} parent=11 // pred_check_branch
        %298 = sbr.rel (%p296) target = $region32
      $region31: #{_adaptive_decoder_forward.2} parent=11 // pred_region
        _
      $region32: #{_adaptive_decoder_forward.2} parent=11 // pred_fallthru
        _
      // Predicated region
      $region33: #{_adaptive_decoder_forward.2} parent=11 // pred_check
        %p299 = pneg %p201
      $region34: #{_adaptive_decoder_forward.2} parent=11 // pred_check_branch
        %301 = sbr.rel (%p299) target = $region36
      $region35: #{_adaptive_decoder_forward.2} parent=11 // pred_region
        _
      $region36: #{_adaptive_decoder_forward.2} parent=11 // pred_fallthru
        _
      // Predicated region
      $region37: #{_adaptive_decoder_forward.2} parent=11 // pred_check
        %p302 = pneg %p222
      $region38: #{_adaptive_decoder_forward.2} parent=11 // pred_check_branch
        %304 = sbr.rel (%p302) target = $region40
      $region39: #{_adaptive_decoder_forward.2} parent=11 // pred_region
        _
      $region40: #{_adaptive_decoder_forward.2} parent=11 // pred_fallthru
        _
      // Predicated region
      $region41: #{_adaptive_decoder_forward.2} parent=11 // pred_check
        %p305 = pneg %p243
      $region42: #{_adaptive_decoder_forward.2} parent=11 // pred_check_branch
        %307 = sbr.rel (%p305) target = $region44
      $region43: #{_adaptive_decoder_forward.2} parent=11 // pred_region
        _
      $region44: #{_adaptive_decoder_forward.2} parent=11 // pred_fallthru
        _
    $region12: #{_adaptive_decoder_forward.2} parent=5 // pred_fallthru
      _
    %p308 = scmp.lt.s32.totalorder %s23, 2
    // Predicated region
    $region45: #{_adaptive_decoder_forward.2} parent=5 // pred_check
      %p309 = pneg %p308
    $region46: #{_adaptive_decoder_forward.2} parent=5 // pred_check_branch
      %311 = sbr.rel (%p309) target = $region48
    $region47: #{_adaptive_decoder_forward.2} parent=5 // pred_region
      // Predicated region
      $region49: #{_adaptive_decoder_forward.2} parent=47 // pred_check
        %p312 = pneg %p43
      $region50: #{_adaptive_decoder_forward.2} parent=47 // pred_check_branch
        %314 = sbr.rel (%p312) target = $region52
      $region51: #{_adaptive_decoder_forward.2} parent=47 // pred_region
        %p315 = scmp.lt.s32.totalorder %s23, 1
        %s316 = scalar_select %p315, %s23, 1
        %s317 = smul.addr %s316, 4
        %s318 = smul.addr %s317, 8
        %s319 = scalar_lea.vmem %s1, %s318
      $region52: #{_adaptive_decoder_forward.2} parent=47 // pred_fallthru
        _
      // Predicated region
      $region53: #{_adaptive_decoder_forward.2} parent=47 // pred_check
        %p320 = pneg %p69
      $region54: #{_adaptive_decoder_forward.2} parent=47 // pred_check_branch
        %322 = sbr.rel (%p320) target = $region56
      $region55: #{_adaptive_decoder_forward.2} parent=47 // pred_region
        %p323 = scmp.lt.s32.totalorder %s23, 1
        %s324 = scalar_select %p323, %s23, 1
        %s325 = smul.addr %s324, 16
        %s326 = smul.addr %s325, 8
        %s327 = scalar_lea.vmem %s2, %s326
      $region56: #{_adaptive_decoder_forward.2} parent=47 // pred_fallthru
        _
    $region48: #{_adaptive_decoder_forward.2} parent=5 // pred_fallthru
      _
    %p328 = scmp.le.s32.totalorder 1, %s23
    %p329 = scmp.lt.s32.totalorder %s23, 3
    %p330 = pnand %p328, %p329
    %p331 = pneg %p330
    // Predicated region
    $region57: #{_adaptive_decoder_forward.2} parent=5 // pred_check
      _
    $region58: #{_adaptive_decoder_forward.2} parent=5 // pred_check_branch
      %333 = sbr.rel (%p330) target = $region60
    $region59: #{_adaptive_decoder_forward.2} parent=5 // pred_region
      %s334 = ssub.s32 %s23, 1
      %p335 = scmp.lt.s32.totalorder %s28, 1
      %s336 = scalar_select %p335, %s28, 1
      %s337 = smul.addr %s336, 4
      %s338 = smul.addr %s337, 8
      %s339 = scalar_lea.vmem %s1, %s338
      %p340 = pneg %p49
      %p341 = pneg %p46
      %p342 = scmp.lt.s32.totalorder %s28, 1
      %s343 = scalar_select %p342, %s28, 1
      %s344 = smul.addr %s343, 16
      %s345 = smul.addr %s344, 8
      %s346 = scalar_lea.vmem %s2, %s345
      %p347 = pneg %p75
      %p348 = pneg %p72
      %p349 = pneg %p96
      %p350 = pneg %p93
      %p351 = pneg %p117
      %p352 = pneg %p114
      %p353 = pneg %p138
      %p354 = pneg %p135
      %p355 = pneg %p159
      %p356 = pneg %p156
      %p357 = pneg %p180
      %p358 = pneg %p177
      %p359 = pneg %p201
      %p360 = pneg %p198
      %p361 = pneg %p222
      %p362 = pneg %p219
      %p363 = pneg %p243
      %p364 = pneg %p240
      %p365 = pneg %p269
      %p366 = pneg %p266
      %p367 = scmp.lt.s32.totalorder %s28, 1
      %s368 = scalar_select %p367, %s28, 1
      %s369 = smul.addr %s368, 4
      %s370 = smul.addr %s369, 8
      %s371 = scalar_lea.vmem %s11, %s370
      %p372 = scmp.lt.s32.totalorder %s28, 1
      %s373 = scalar_select %p372, %s28, 1
      %s374 = smul.addr %s373, 4
      %s375 = smul.addr %s374, 8
      %s376 = scalar_lea.vmem %s1, %s375
      %p377 = scmp.lt.s32.totalorder %s28, 1
      %s378 = scalar_select %p377, %s28, 1
      %s379 = smul.addr %s378, 16
      %s380 = smul.addr %s379, 8
      %s381 = scalar_lea.vmem %s2, %s380
      %p382 = scmp.lt.s32.totalorder %s28, 1
      %s383 = scalar_select %p382, %s28, 1
      %s384 = smul.addr %s383, 4
      %s385 = smul.addr %s384, 8
      %s386 = scalar_lea.vmem %s11, %s385
      %v388 = vld [vmem:[%s376] sm:$0xff]
      %v389 = vld [vmem:[%s376 + $0x8] sm:$0xff]
      %v390 = vld [vmem:[%s376 + $0x10] sm:$0xff]
      %v391 = vld [vmem:[%s376 + $0x18] sm:$0xff]
      %s392 = sld [smem:[#allocation4 + %s28]]
      %p393 = scmp.gt.s32.totalorder %s392, 1
      %s394 = scalar_select %p393, %s392, 1
      %s395 = scvt.s32.f32 %s394
      %v396 = vlaneseq
      %v397 = vshrl.u32 %v396, 7
      %v398 = vadd.s32 %v397, 8
      %v399 = vadd.s32 %v397, 16
      %v400 = vadd.s32 %v397, 24
      %v401 = vstv %s392
      %vm402 = vcmp.lt.s32.totalorder %v397, %v401
      %vm403 = vcmp.lt.s32.totalorder %v398, %v401
      %vm404 = vcmp.lt.s32.totalorder %v399, %v401
      %vm405 = vcmp.lt.s32.totalorder %v400, %v401
      %v406 = vsel %vm402, 1, 0
      %v407 = vsel %vm403, 1, 0
      %v408 = vsel %vm404, 1, 0
      %v409 = vsel %vm405, 1, 0
      %v410 = vcvt.s32.f32 %v406
      %v411 = vcvt.s32.f32 %v407
      %v412 = vcvt.s32.f32 %v408
      %v413 = vcvt.s32.f32 %v409
      %v414 = vadd.f32 %v388, %v389
      %v415 = vadd.f32 %v414, %v390
      %v416 = vadd.f32 %v415, %v391
      %v417 = vrot.slane %v416, 4
      %v418 = vadd.f32 %v416, %v417
      %v419 = vrot.slane %v418, 2
      %v420 = vadd.f32 %v418, %v419
      %v421 = vrot.slane %v420, 1
      %v422 = vadd.f32 %v420, %v421
      %v423 = vmul.f32 %v388, %v388
      %v424 = vmul.f32 %v389, %v389
      %v425 = vmul.f32 %v390, %v390
      %v426 = vmul.f32 %v391, %v391
      %v427 = vadd.f32 %v423, %v424
      %v428 = vadd.f32 %v427, %v425
      %v429 = vadd.f32 %v428, %v426
      %v430 = vrot.slane %v429, 4
      %v431 = vadd.f32 %v429, %v430
      %v432 = vrot.slane %v431, 2
      %v433 = vadd.f32 %v431, %v432
      %v434 = vrot.slane %v433, 1
      %v435 = vadd.f32 %v433, %v434
      %v436 = vstv %s395
      %v437 = vrcp.pop %v436
      %v438 = vmul.f32 %v422, %v437
      %v439 = vmul.f32 %v438, 2.0
      %v440 = vmul.f32 %v439, %v422
      %v441 = vsub.f32 %v435, %v440
      %v442 = vmul.f32 %v438, %v438
      %v443 = vmul.f32 %v442, 32.0
      %v444 = vadd.f32 %v441, %v443
      %v445 = vmul.f32 %v444, %v437
      %v446 = vmax.f32 %v445, 0.0
      %v447 = vadd.f32 %v446, 1e-08
      %v448 = vrsqrt.pop %v447
      %v449 = vmul.f32 %v447, %v448
      %vm450 = vcmp.eq.f32.partialorder %v447, inf
      %v451 = vsel %vm450, %v447, %v449
      %vm452 = vcmp.eq.f32.partialorder %v447, 0.0
      %v453 = vand.u32 %v447, 2147483648
      %v454 = vsel %vm452, %v453, %v451
      %v455 = vsub.f32 %v388, %v438
      %v456 = vsub.f32 %v389, %v438
      %v457 = vsub.f32 %v390, %v438
      %v458 = vsub.f32 %v391, %v438
      %v459 = vrcp.pop %v454
      %v460 = vmul.f32 %v455, %v459
      %v461 = vmul.f32 %v456, %v459
      %v462 = vmul.f32 %v457, %v459
      %v463 = vmul.f32 %v458, %v459
      %v464 = vmul.f32 %v460, %v410
      %v465 = vmul.f32 %v461, %v411
      %v466 = vmul.f32 %v462, %v412
      %v467 = vmul.f32 %v463, %v413
      %v468 = vld [vmem:[%s381] sm:$0xff]
      %v469 = vld [vmem:[%s381 + $0x8] sm:$0xff]
      %v470 = vld [vmem:[%s381 + $0x10] sm:$0xff]
      %v471 = vld [vmem:[%s381 + $0x18] sm:$0xff]
      %v472 = vld [vmem:[%s381 + $0x20] sm:$0xff]
      %v473 = vld [vmem:[%s381 + $0x28] sm:$0xff]
      %v474 = vld [vmem:[%s381 + $0x30] sm:$0xff]
      %v475 = vld [vmem:[%s381 + $0x38] sm:$0xff]
      %v476 = vld [vmem:[%s381 + $0x40] sm:$0xff]
      %v477 = vld [vmem:[%s381 + $0x48] sm:$0xff]
      %v478 = vld [vmem:[%s381 + $0x50] sm:$0xff]
      %v479 = vld [vmem:[%s381 + $0x58] sm:$0xff]
      %v480 = vld [vmem:[%s381 + $0x60] sm:$0xff]
      %v481 = vld [vmem:[%s381 + $0x68] sm:$0xff]
      %v482 = vld [vmem:[%s381 + $0x70] sm:$0xff]
      %v483 = vld [vmem:[%s381 + $0x78] sm:$0xff]
      %v484 = vld [vmem:[%s3] sm:$0xff]
      %v485 = vld [vmem:[%s3 + $0x8] sm:$0xff]
      %v486 = vld [vmem:[%s3 + $0x10] sm:$0xff]
      %v487 = vld [vmem:[%s3 + $0x18] sm:$0xff]
      %v488 = vld [vmem:[%s3 + $0x20] sm:$0xff]
      %v489 = vld [vmem:[%s3 + $0x28] sm:$0xff]
      %v490 = vld [vmem:[%s3 + $0x30] sm:$0xff]
      %v491 = vld [vmem:[%s3 + $0x38] sm:$0xff]
      %v492 = vld [vmem:[%s3 + $0x40] sm:$0xff]
      %v493 = vld [vmem:[%s3 + $0x48] sm:$0xff]
      %v494 = vld [vmem:[%s3 + $0x50] sm:$0xff]
      %v495 = vld [vmem:[%s3 + $0x58] sm:$0xff]
      %v496 = vld [vmem:[%s3 + $0x60] sm:$0xff]
      %v497 = vld [vmem:[%s3 + $0x68] sm:$0xff]
      %v498 = vld [vmem:[%s3 + $0x70] sm:$0xff]
      %v499 = vld [vmem:[%s3 + $0x78] sm:$0xff]
      %501 = vset.pattern.permute.xlu0 0
      %502 = vperm.xlu0 %501, %v468
      %v503 = vpop.permute.xlu0 %502
      %506 = vset.pattern.permute.xlu0 0
      %507 = vperm.xlu0 %506, %v469
      %v508 = vpop.permute.xlu0 %507
      %511 = vset.pattern.permute.xlu0 0
      %512 = vperm.xlu0 %511, %v470
      %v513 = vpop.permute.xlu0 %512
      %516 = vset.pattern.permute.xlu0 0
      %517 = vperm.xlu0 %516, %v471
      %v518 = vpop.permute.xlu0 %517
      %521 = vset.pattern.permute.xlu0 0
      %522 = vperm.xlu0 %521, %v472
      %v523 = vpop.permute.xlu0 %522
      %526 = vset.pattern.permute.xlu0 0
      %527 = vperm.xlu0 %526, %v473
      %v528 = vpop.permute.xlu0 %527
      %531 = vset.pattern.permute.xlu0 0
      %532 = vperm.xlu0 %531, %v474
      %v533 = vpop.permute.xlu0 %532
      %536 = vset.pattern.permute.xlu0 0
      %537 = vperm.xlu0 %536, %v475
      %v538 = vpop.permute.xlu0 %537
      %541 = vset.pattern.permute.xlu0 0
      %542 = vperm.xlu0 %541, %v476
      %v543 = vpop.permute.xlu0 %542
      %546 = vset.pattern.permute.xlu0 0
      %547 = vperm.xlu0 %546, %v477
      %v548 = vpop.permute.xlu0 %547
      %551 = vset.pattern.permute.xlu0 0
      %552 = vperm.xlu0 %551, %v478
      %v553 = vpop.permute.xlu0 %552
      %556 = vset.pattern.permute.xlu0 0
      %557 = vperm.xlu0 %556, %v479
      %v558 = vpop.permute.xlu0 %557
      %561 = vset.pattern.permute.xlu0 0
      %562 = vperm.xlu0 %561, %v480
      %v563 = vpop.permute.xlu0 %562
      %566 = vset.pattern.permute.xlu0 0
      %567 = vperm.xlu0 %566, %v481
      %v568 = vpop.permute.xlu0 %567
      %571 = vset.pattern.permute.xlu0 0
      %572 = vperm.xlu0 %571, %v482
      %v573 = vpop.permute.xlu0 %572
      %576 = vset.pattern.permute.xlu0 0
      %577 = vperm.xlu0 %576, %v483
      %v578 = vpop.permute.xlu0 %577
      %v580 = vmul.f32 %v503, %v484
      %v581 = vmul.f32 %v508, %v485
      %v582 = vmul.f32 %v513, %v486
      %v583 = vmul.f32 %v518, %v487
      %v584 = vmul.f32 %v523, %v488
      %v585 = vmul.f32 %v528, %v489
      %v586 = vmul.f32 %v533, %v490
      %v587 = vmul.f32 %v538, %v491
      %v588 = vmul.f32 %v543, %v492
      %v589 = vmul.f32 %v548, %v493
      %v590 = vmul.f32 %v553, %v494
      %v591 = vmul.f32 %v558, %v495
      %v592 = vmul.f32 %v563, %v496
      %v593 = vmul.f32 %v568, %v497
      %v594 = vmul.f32 %v573, %v498
      %v595 = vmul.f32 %v578, %v499
      %v596 = vadd.f32 %v580, %v581
      %v597 = vadd.f32 %v596, %v582
      %v598 = vadd.f32 %v597, %v583
      %v599 = vadd.f32 %v598, %v584
      %v600 = vadd.f32 %v599, %v585
      %v601 = vadd.f32 %v600, %v586
      %v602 = vadd.f32 %v601, %v587
      %v603 = vadd.f32 %v602, %v588
      %v604 = vadd.f32 %v603, %v589
      %v605 = vadd.f32 %v604, %v590
      %v606 = vadd.f32 %v605, %v591
      %v607 = vadd.f32 %v606, %v592
      %v608 = vadd.f32 %v607, %v593
      %v609 = vadd.f32 %v608, %v594
      %v610 = vadd.f32 %v609, %v595
      %v611 = vrot.slane %v610, 4
      %v612 = vadd.f32 %v610, %v611
      %v613 = vrot.slane %v612, 2
      %v614 = vadd.f32 %v612, %v613
      %v615 = vrot.slane %v614, 1
      %v616 = vadd.f32 %v614, %v615
      %v617 = vld [vmem:[%s4] sm:$0x1]
      %v618 = vadd.f32 %v616, %v617
      %v619 = vld [vmem:[%s5] sm:$0xff]
      %v620 = vld [vmem:[%s5 + $0x8] sm:$0xff]
      %v621 = vld [vmem:[%s5 + $0x10] sm:$0xff]
      %v622 = vld [vmem:[%s5 + $0x18] sm:$0xff]
      %v623 = vld [vmem:[%s5 + $0x20] sm:$0xff]
      %v624 = vld [vmem:[%s5 + $0x28] sm:$0xff]
      %v625 = vld [vmem:[%s5 + $0x30] sm:$0xff]
      %v626 = vld [vmem:[%s5 + $0x38] sm:$0xff]
      %v627 = vld [vmem:[%s5 + $0x40] sm:$0xff]
      %v628 = vld [vmem:[%s5 + $0x48] sm:$0xff]
      %v629 = vld [vmem:[%s5 + $0x50] sm:$0xff]
      %v630 = vld [vmem:[%s5 + $0x58] sm:$0xff]
      %v631 = vld [vmem:[%s5 + $0x60] sm:$0xff]
      %v632 = vld [vmem:[%s5 + $0x68] sm:$0xff]
      %v633 = vld [vmem:[%s5 + $0x70] sm:$0xff]
      %v634 = vld [vmem:[%s5 + $0x78] sm:$0xff]
      %v635 = vmul.f32 %v503, %v619
      %v636 = vmul.f32 %v508, %v620
      %v637 = vmul.f32 %v513, %v621
      %v638 = vmul.f32 %v518, %v622
      %v639 = vmul.f32 %v523, %v623
      %v640 = vmul.f32 %v528, %v624
      %v641 = vmul.f32 %v533, %v625
      %v642 = vmul.f32 %v538, %v626
      %v643 = vmul.f32 %v543, %v627
      %v644 = vmul.f32 %v548, %v628
      %v645 = vmul.f32 %v553, %v629
      %v646 = vmul.f32 %v558, %v630
      %v647 = vmul.f32 %v563, %v631
      %v648 = vmul.f32 %v568, %v632
      %v649 = vmul.f32 %v573, %v633
      %v650 = vmul.f32 %v578, %v634
      %v651 = vadd.f32 %v635, %v636
      %v652 = vadd.f32 %v651, %v637
      %v653 = vadd.f32 %v652, %v638
      %v654 = vadd.f32 %v653, %v639
      %v655 = vadd.f32 %v654, %v640
      %v656 = vadd.f32 %v655, %v641
      %v657 = vadd.f32 %v656, %v642
      %v658 = vadd.f32 %v657, %v643
      %v659 = vadd.f32 %v658, %v644
      %v660 = vadd.f32 %v659, %v645
      %v661 = vadd.f32 %v660, %v646
      %v662 = vadd.f32 %v661, %v647
      %v663 = vadd.f32 %v662, %v648
      %v664 = vadd.f32 %v663, %v649
      %v665 = vadd.f32 %v664, %v650
      %v666 = vrot.slane %v665, 4
      %v667 = vadd.f32 %v665, %v666
      %v668 = vrot.slane %v667, 2
      %v669 = vadd.f32 %v667, %v668
      %v670 = vrot.slane %v669, 1
      %v671 = vadd.f32 %v669, %v670
      %v672 = vld [vmem:[%s6] sm:$0x1]
      %v673 = vadd.f32 %v671, %v672
      %v674 = vlaneseq
      %v675 = vshrl.u32 %v674, 7
      %v676 = vsub.s32 0, %v675
      %v677 = vrot.slane %v618, %v676
      %v678 = vmul.f32 %v464, %v677
      %v679 = vmul.f32 %v465, %v677
      %v680 = vmul.f32 %v466, %v677
      %v681 = vmul.f32 %v467, %v677
      %v682 = vlaneseq
      %v683 = vshrl.u32 %v682, 7
      %v684 = vsub.s32 0, %v683
      %v685 = vrot.slane %v673, %v684
      %v686 = vadd.f32 %v678, %v685
      %v687 = vadd.f32 %v679, %v685
      %v688 = vadd.f32 %v680, %v685
      %v689 = vadd.f32 %v681, %v685
      %690 = vst [vmem:[#allocation2] sm:$0x3] 0.0
      %vm695 = vcmask 1041408
      %v696 = vrot.slane %v686, 6
      %v697 = vrot.slane %v687, 6
      %v698 = vsel %vm695, %v696, %v697
      %v699 = vrot.slane %v688, 6
      %v700 = vsel %vm695, %v697, %v699
      %v701 = vrot.slane %v689, 6
      %v702 = vsel %vm695, %v699, %v701
      %707 = vst [vmem:[#allocation2] sm:$0xfc] %v696
      %708 = vst [vmem:[#allocation2 + $0x28] sm:$0xff] %v698
      %709 = vst [vmem:[#allocation2 + $0x50] sm:$0xff] %v700
      %710 = vst [vmem:[#allocation2 + $0x78] sm:$0xff] %v702
      %711 = vst [vmem:[#allocation2 + $0x8] sm:$0x1] 0.0
      %vm712 = vcmask 1040384
      %v713 = vrot.slane %v686, 7
      %v714 = vrot.slane %v687, 7
      %v715 = vsel %vm712, %v713, %v714
      %v716 = vrot.slane %v688, 7
      %v717 = vsel %vm712, %v714, %v716
      %v718 = vrot.slane %v689, 7
      %v719 = vsel %vm712, %v716, %v718
      %724 = vst [vmem:[#allocation2 + $0x8] sm:$0xfe] %v713
      %725 = vst [vmem:[#allocation2 + $0x30] sm:$0xff] %v715
      %726 = vst [vmem:[#allocation2 + $0x58] sm:$0xff] %v717
      %727 = vst [vmem:[#allocation2 + $0x80] sm:$0xff] %v719
      %728 = vst [vmem:[#allocation2 + $0x10] sm:$0xff] %v686
      %729 = vst [vmem:[#allocation2 + $0x38] sm:$0xff] %v687
      %730 = vst [vmem:[#allocation2 + $0x60] sm:$0xff] %v688
      %731 = vst [vmem:[#allocation2 + $0x88] sm:$0xff] %v689
      %vm732 = vcmask 1046528
      %v733 = vrot.slane %v686, 1
      %v734 = vrot.slane %v687, 1
      %v735 = vsel %vm732, %v733, %v734
      %v736 = vrot.slane %v688, 1
      %v737 = vsel %vm732, %v734, %v736
      %v738 = vrot.slane %v689, 1
      %v739 = vsel %vm732, %v736, %v738
      %744 = vst [vmem:[#allocation2 + $0x18] sm:$0xff] %v735
      %745 = vst [vmem:[#allocation2 + $0x40] sm:$0xff] %v737
      %746 = vst [vmem:[#allocation2 + $0x68] sm:$0xff] %v739
      %747 = vst [vmem:[#allocation2 + $0x90] sm:$0x7f] %v738
      %748 = vst [vmem:[#allocation2 + $0x97] sm:$0x1] 0.0
      %vm749 = vcmask 1045504
      %v750 = vrot.slane %v686, 2
      %v751 = vrot.slane %v687, 2
      %v752 = vsel %vm749, %v750, %v751
      %v753 = vrot.slane %v688, 2
      %v754 = vsel %vm749, %v751, %v753
      %v755 = vrot.slane %v689, 2
      %v756 = vsel %vm749, %v753, %v755
      %761 = vst [vmem:[#allocation2 + $0x20] sm:$0xff] %v752
      %762 = vst [vmem:[#allocation2 + $0x48] sm:$0xff] %v754
      %763 = vst [vmem:[#allocation2 + $0x70] sm:$0xff] %v756
      %764 = vst [vmem:[#allocation2 + $0x98] sm:$0x3f] %v755
      %765 = vst [vmem:[#allocation2 + $0x98] sm:$0xc0] 0.0
      %v766 = vld [vmem:[#allocation2] sm:$0xff]
      %v767 = vld [vmem:[#allocation2 + $0x8] sm:$0xff]
      %v768 = vld [vmem:[#allocation2 + $0x10] sm:$0xff]
      %v769 = vld [vmem:[#allocation2 + $0x18] sm:$0xff]
      %v770 = vld [vmem:[#allocation2 + $0x20] sm:$0xff]
      %v771 = vld [vmem:[#allocation2 + $0x28] sm:$0xff]
      %v772 = vld [vmem:[#allocation2 + $0x30] sm:$0xff]
      %v773 = vld [vmem:[#allocation2 + $0x38] sm:$0xff]
      %v774 = vld [vmem:[#allocation2 + $0x40] sm:$0xff]
      %v775 = vld [vmem:[#allocation2 + $0x48] sm:$0xff]
      %v776 = vld [vmem:[#allocation2 + $0x50] sm:$0xff]
      %v777 = vld [vmem:[#allocation2 + $0x58] sm:$0xff]
      %v778 = vld [vmem:[#allocation2 + $0x60] sm:$0xff]
      %v779 = vld [vmem:[#allocation2 + $0x68] sm:$0xff]
      %v780 = vld [vmem:[#allocation2 + $0x70] sm:$0xff]
      %v781 = vld [vmem:[#allocation2 + $0x78] sm:$0xff]
      %v782 = vld [vmem:[#allocation2 + $0x80] sm:$0xff]
      %v783 = vld [vmem:[#allocation2 + $0x88] sm:$0xff]
      %v784 = vld [vmem:[#allocation2 + $0x90] sm:$0xff]
      %v785 = vld [vmem:[#allocation2 + $0x98] sm:$0xff]
      %v786 = vpack.c.bf16 %v771, %v766
      %v787 = vpack.c.bf16 %v772, %v767
      %v788 = vpack.c.bf16 %v773, %v768
      %v789 = vpack.c.bf16 %v774, %v769
      %v790 = vpack.c.bf16 %v775, %v770
      %v791 = vpack.c.bf16 %v781, %v776
      %v792 = vpack.c.bf16 %v782, %v777
      %v793 = vpack.c.bf16 %v783, %v778
      %v794 = vpack.c.bf16 %v784, %v779
      %v795 = vpack.c.bf16 %v785, %v780
      %v796 = vld [vmem:[%s7] sm:$0xf]
      %v797 = vld [vmem:[%s7 + $0x4] sm:$0xf]
      %v798 = vld [vmem:[%s7 + $0x8] sm:$0xf]
      %v799 = vld [vmem:[%s7 + $0xc] sm:$0xf]
      %v800 = vld [vmem:[%s7 + $0x10] sm:$0xf]
      %v801 = vld [vmem:[%s7 + $0x14] sm:$0xf]
      %v802 = vld [vmem:[%s7 + $0x18] sm:$0xf]
      %v803 = vld [vmem:[%s7 + $0x1c] sm:$0xf]
      %v804 = vld [vmem:[%s7 + $0x20] sm:$0xf]
      %v805 = vld [vmem:[%s7 + $0x24] sm:$0xf]
      %v806 = vld [vmem:[%s7 + $0x28] sm:$0xf]
      %v807 = vld [vmem:[%s7 + $0x2c] sm:$0xf]
      %v808 = vld [vmem:[%s7 + $0x30] sm:$0xf]
      %v809 = vld [vmem:[%s7 + $0x34] sm:$0xf]
      %v810 = vld [vmem:[%s7 + $0x38] sm:$0xf]
      %v811 = vld [vmem:[%s7 + $0x3c] sm:$0xf]
      %v812 = vld [vmem:[%s7 + $0x40] sm:$0xf]
      %v813 = vld [vmem:[%s7 + $0x44] sm:$0xf]
      %v814 = vld [vmem:[%s7 + $0x48] sm:$0xf]
      %v815 = vld [vmem:[%s7 + $0x4c] sm:$0xf]
      %v816 = vld [vmem:[%s7 + $0x50] sm:$0xf]
      %v817 = vld [vmem:[%s7 + $0x54] sm:$0xf]
      %v818 = vld [vmem:[%s7 + $0x58] sm:$0xf]
      %v819 = vld [vmem:[%s7 + $0x5c] sm:$0xf]
      %v820 = vld [vmem:[%s7 + $0x60] sm:$0xf]
      %v821 = vld [vmem:[%s7 + $0x64] sm:$0xf]
      %v822 = vld [vmem:[%s7 + $0x68] sm:$0xf]
      %v823 = vld [vmem:[%s7 + $0x6c] sm:$0xf]
      %v824 = vld [vmem:[%s7 + $0x70] sm:$0xf]
      %v825 = vld [vmem:[%s7 + $0x74] sm:$0xf]
      %v826 = vld [vmem:[%s7 + $0x78] sm:$0xf]
      %v827 = vld [vmem:[%s7 + $0x7c] sm:$0xf]
      %v828 = vld [vmem:[%s7 + $0x80] sm:$0xf]
      %v829 = vld [vmem:[%s7 + $0x84] sm:$0xf]
      %v830 = vld [vmem:[%s7 + $0x88] sm:$0xf]
      %v831 = vld [vmem:[%s7 + $0x8c] sm:$0xf]
      %v832 = vld [vmem:[%s7 + $0x90] sm:$0xf]
      %v833 = vld [vmem:[%s7 + $0x94] sm:$0xf]
      %v834 = vld [vmem:[%s7 + $0x98] sm:$0xf]
      %v835 = vld [vmem:[%s7 + $0x9c] sm:$0xf]
      %v836 = vld [vmem:[%s7 + $0xa0] sm:$0xf]
      %v837 = vld [vmem:[%s7 + $0xa4] sm:$0xf]
      %v838 = vld [vmem:[%s7 + $0xa8] sm:$0xf]
      %v839 = vld [vmem:[%s7 + $0xac] sm:$0xf]
      %v840 = vld [vmem:[%s7 + $0xb0] sm:$0xf]
      %v841 = vld [vmem:[%s7 + $0xb4] sm:$0xf]
      %v842 = vld [vmem:[%s7 + $0xb8] sm:$0xf]
      %v843 = vld [vmem:[%s7 + $0xbc] sm:$0xf]
      %v844 = vld [vmem:[%s7 + $0xc0] sm:$0xf]
      %v845 = vld [vmem:[%s7 + $0xc4] sm:$0xf]
      %v846 = vld [vmem:[%s7 + $0xc8] sm:$0xf]
      %v847 = vld [vmem:[%s7 + $0xcc] sm:$0xf]
      %v848 = vld [vmem:[%s7 + $0xd0] sm:$0xf]
      %v849 = vld [vmem:[%s7 + $0xd4] sm:$0xf]
      %v850 = vld [vmem:[%s7 + $0xd8] sm:$0xf]
      %v851 = vld [vmem:[%s7 + $0xdc] sm:$0xf]
      %v852 = vld [vmem:[%s7 + $0xe0] sm:$0xf]
      %v853 = vld [vmem:[%s7 + $0xe4] sm:$0xf]
      %v854 = vld [vmem:[%s7 + $0xe8] sm:$0xf]
      %v855 = vld [vmem:[%s7 + $0xec] sm:$0xf]
      %v856 = vld [vmem:[%s7 + $0xf0] sm:$0xf]
      %v857 = vld [vmem:[%s7 + $0xf4] sm:$0xf]
      %v858 = vld [vmem:[%s7 + $0xf8] sm:$0xf]
      %v859 = vld [vmem:[%s7 + $0xfc] sm:$0xf]
      %v860 = vld [vmem:[%s7 + $0x100] sm:$0xf]
      %v861 = vld [vmem:[%s7 + $0x104] sm:$0xf]
      %v862 = vld [vmem:[%s7 + $0x108] sm:$0xf]
      %v863 = vld [vmem:[%s7 + $0x10c] sm:$0xf]
      %v864 = vld [vmem:[%s7 + $0x110] sm:$0xf]
      %v865 = vld [vmem:[%s7 + $0x114] sm:$0xf]
      %v866 = vld [vmem:[%s7 + $0x118] sm:$0xf]
      %v867 = vld [vmem:[%s7 + $0x11c] sm:$0xf]
      %v868 = vld [vmem:[%s7 + $0x120] sm:$0xf]
      %v869 = vld [vmem:[%s7 + $0x124] sm:$0xf]
      %v870 = vld [vmem:[%s7 + $0x128] sm:$0xf]
      %v871 = vld [vmem:[%s7 + $0x12c] sm:$0xf]
      %v872 = vld [vmem:[%s7 + $0x130] sm:$0xf]
      %v873 = vld [vmem:[%s7 + $0x134] sm:$0xf]
      %v874 = vld [vmem:[%s7 + $0x138] sm:$0xf]
      %v875 = vld [vmem:[%s7 + $0x13c] sm:$0xf]
      %v876 = vld [vmem:[%s8] sm:$0x1]
      %v878 = vlaneseq
      %v879 = vshrl.u32 %v878, 7
      %v880 = vsub.s32 0, %v879
      %v881 = vrot.slane %v876, %v880
      %v963 = vunpack.c.l.b16 %v796
      %v964 = vunpack.c.l.b16 %v797
      %v965 = vunpack.c.l.b16 %v798
      %v966 = vunpack.c.l.b16 %v799
      %v967 = vunpack.c.l.b16 %v800
      %v968 = vunpack.c.l.b16 %v801
      %v969 = vunpack.c.l.b16 %v802
      %v970 = vunpack.c.l.b16 %v803
      %v971 = vunpack.c.l.b16 %v804
      %v972 = vunpack.c.l.b16 %v805
      %v973 = vunpack.c.l.b16 %v806
      %v974 = vunpack.c.l.b16 %v807
      %v975 = vunpack.c.l.b16 %v808
      %v976 = vunpack.c.l.b16 %v809
      %v977 = vunpack.c.l.b16 %v810
      %v978 = vunpack.c.l.b16 %v811
      %v979 = vunpack.c.l.b16 %v812
      %v980 = vunpack.c.l.b16 %v813
      %v981 = vunpack.c.l.b16 %v814
      %v982 = vunpack.c.l.b16 %v815
      %v983 = vunpack.c.l.b16 %v816
      %v984 = vunpack.c.l.b16 %v817
      %v985 = vunpack.c.l.b16 %v818
      %v986 = vunpack.c.l.b16 %v819
      %v987 = vunpack.c.l.b16 %v820
      %v988 = vunpack.c.l.b16 %v821
      %v989 = vunpack.c.l.b16 %v822
      %v990 = vunpack.c.l.b16 %v823
      %v991 = vunpack.c.l.b16 %v824
      %v992 = vunpack.c.l.b16 %v825
      %v993 = vunpack.c.l.b16 %v826
      %v994 = vunpack.c.l.b16 %v827
      %v995 = vunpack.c.l.b16 %v828
      %v996 = vunpack.c.l.b16 %v829
      %v997 = vunpack.c.l.b16 %v830
      %v998 = vunpack.c.l.b16 %v831
      %v999 = vunpack.c.l.b16 %v832
      %v1000 = vunpack.c.l.b16 %v833
      %v1001 = vunpack.c.l.b16 %v834
      %v1002 = vunpack.c.l.b16 %v835
      %v1003 = vunpack.c.l.b16 %v836
      %v1004 = vunpack.c.l.b16 %v837
      %v1005 = vunpack.c.l.b16 %v838
      %v1006 = vunpack.c.l.b16 %v839
      %v1007 = vunpack.c.l.b16 %v840
      %v1008 = vunpack.c.l.b16 %v841
      %v1009 = vunpack.c.l.b16 %v842
      %v1010 = vunpack.c.l.b16 %v843
      %v1011 = vunpack.c.l.b16 %v844
      %v1012 = vunpack.c.l.b16 %v845
      %v1013 = vunpack.c.l.b16 %v846
      %v1014 = vunpack.c.l.b16 %v847
      %v1015 = vunpack.c.l.b16 %v848
      %v1016 = vunpack.c.l.b16 %v849
      %v1017 = vunpack.c.l.b16 %v850
      %v1018 = vunpack.c.l.b16 %v851
      %v1019 = vunpack.c.l.b16 %v852
      %v1020 = vunpack.c.l.b16 %v853
      %v1021 = vunpack.c.l.b16 %v854
      %v1022 = vunpack.c.l.b16 %v855
      %v1023 = vunpack.c.l.b16 %v856
      %v1024 = vunpack.c.l.b16 %v857
      %v1025 = vunpack.c.l.b16 %v858
      %v1026 = vunpack.c.l.b16 %v859
      %v1027 = vunpack.c.l.b16 %v860
      %v1028 = vunpack.c.l.b16 %v861
      %v1029 = vunpack.c.l.b16 %v862
      %v1030 = vunpack.c.l.b16 %v863
      %v1031 = vunpack.c.l.b16 %v864
      %v1032 = vunpack.c.l.b16 %v865
      %v1033 = vunpack.c.l.b16 %v866
      %v1034 = vunpack.c.l.b16 %v867
      %v1035 = vunpack.c.l.b16 %v868
      %v1036 = vunpack.c.l.b16 %v869
      %v1037 = vunpack.c.l.b16 %v870
      %v1038 = vunpack.c.l.b16 %v871
      %v1039 = vunpack.c.l.b16 %v872
      %v1040 = vunpack.c.l.b16 %v873
      %v1041 = vunpack.c.l.b16 %v874
      %v1042 = vunpack.c.l.b16 %v875
      %v1043 = vpack.c.b16 %v964, %v963
      %v1044 = vpack.c.b16 %v966, %v965
      %v1045 = vpack.c.b16 %v968, %v967
      %v1046 = vpack.c.b16 %v970, %v969
      %v1047 = vpack.c.b16 %v972, %v971
      %v1048 = vpack.c.b16 %v974, %v973
      %v1049 = vpack.c.b16 %v976, %v975
      %v1050 = vpack.c.b16 %v978, %v977
      %v1051 = vpack.c.b16 %v980, %v979
      %v1052 = vpack.c.b16 %v982, %v981
      %v1053 = vpack.c.b16 %v984, %v983
      %v1054 = vpack.c.b16 %v986, %v985
      %v1055 = vpack.c.b16 %v988, %v987
      %v1056 = vpack.c.b16 %v990, %v989
      %v1057 = vpack.c.b16 %v992, %v991
      %v1058 = vpack.c.b16 %v994, %v993
      %v1059 = vpack.c.b16 %v996, %v995
      %v1060 = vpack.c.b16 %v998, %v997
      %v1061 = vpack.c.b16 %v1000, %v999
      %v1062 = vpack.c.b16 %v1002, %v1001
      %v1063 = vpack.c.b16 %v1004, %v1003
      %v1064 = vpack.c.b16 %v1006, %v1005
      %v1065 = vpack.c.b16 %v1008, %v1007
      %v1066 = vpack.c.b16 %v1010, %v1009
      %v1067 = vpack.c.b16 %v1012, %v1011
      %v1068 = vpack.c.b16 %v1014, %v1013
      %v1069 = vpack.c.b16 %v1016, %v1015
      %v1070 = vpack.c.b16 %v1018, %v1017
      %v1071 = vpack.c.b16 %v1020, %v1019
      %v1072 = vpack.c.b16 %v1022, %v1021
      %v1073 = vpack.c.b16 %v1024, %v1023
      %v1074 = vpack.c.b16 %v1026, %v1025
      %v1075 = vpack.c.b16 %v1028, %v1027
      %v1076 = vpack.c.b16 %v1030, %v1029
      %v1077 = vpack.c.b16 %v1032, %v1031
      %v1078 = vpack.c.b16 %v1034, %v1033
      %v1079 = vpack.c.b16 %v1036, %v1035
      %v1080 = vpack.c.b16 %v1038, %v1037
      %v1081 = vpack.c.b16 %v1040, %v1039
      %v1082 = vpack.c.b16 %v1042, %v1041
      %1123 = vmatprep.subr.bf16.mxu0 0
      %1124 = vmatpush1.bf16.msra.mxu0 %v1043
      %1125 = vmatprep.subr.bf16.mxu0 0
      %1126 = vmatpush1.bf16.msra.mxu0 %v1044
      %1127 = vmatprep.subr.bf16.mxu0 0
      %1128 = vmatpush1.bf16.msra.mxu0 %v1045
      %1129 = vmatprep.subr.bf16.mxu0 0
      %1130 = vmatpush1.bf16.msra.mxu0 %v1046
      %1131 = vmatprep.subr.bf16.mxu0 0
      %1132 = vmatpush1.bf16.msra.mxu0 %v1047
      %1133 = vmatprep.subr.bf16.mxu0 0
      %1134 = vmatpush1.bf16.msra.mxu0 %v1048
      %1135 = vmatprep.subr.bf16.mxu0 0
      %1136 = vmatpush1.bf16.msra.mxu0 %v1049
      %1137 = vmatprep.subr.bf16.mxu0 0
      %1138 = vmatpush1.bf16.msra.mxu0 %v1050
      %1139 = vmatprep.subr.bf16.mxu0 0
      %1140 = vmatpush1.bf16.msra.mxu0 %v1051
      %1141 = vmatprep.subr.bf16.mxu0 0
      %1142 = vmatpush1.bf16.msra.mxu0 %v1052
      %1143 = vmatprep.subr.bf16.mxu0 0
      %1144 = vmatpush1.bf16.msra.mxu0 %v1053
      %1145 = vmatprep.subr.bf16.mxu0 0
      %1146 = vmatpush1.bf16.msra.mxu0 %v1054
      %1147 = vmatprep.subr.bf16.mxu0 0
      %1148 = vmatpush1.bf16.msra.mxu0 %v1055
      %1149 = vmatprep.subr.bf16.mxu0 0
      %1150 = vmatpush1.bf16.msra.mxu0 %v1056
      %1151 = vmatprep.subr.bf16.mxu0 0
      %1152 = vmatpush1.bf16.msra.mxu0 %v1057
      %1153 = vmatprep.subr.bf16.mxu0 0
      %1154 = vmatpush1.bf16.msra.mxu0 %v1058
      %1155 = vmatprep.mubr.bf16.mxu0 %v787
      %1156 = vmatmul.mubr.bf16.gmra.mrb[0].mxu0 %v786
      %v1157 = vpop.f32.mrb[0].mxu0
      %v1158 = vadd.f32 %v881, %v1157
      %v1159 = vpop.f32.mrb[0].mxu0
      %v1160 = vpop.f32.mrb[0].mxu0
      %v1161 = vadd.f32 %v881, %v1160
      %v1162 = vpop.f32.mrb[0].mxu0
      %1163 = vmatprep.mubr.bf16.mxu0 %v792
      %1164 = vmatmul.mubr.bf16.gmra.mrb[0].mxu0 %v791
      %v1165 = vpop.f32.mrb[0].mxu0
      %v1166 = vadd.f32 %v881, %v1165
      %v1167 = vpop.f32.mrb[0].mxu0
      %v1168 = vpop.f32.mrb[0].mxu0
      %v1169 = vadd.f32 %v881, %v1168
      %v1170 = vpop.f32.mrb[0].mxu0
      %1171 = vdwg.mxu0
      %1172 = vmatprep.subr.bf16.mxu0 0
      %1173 = vmatpush1.bf16.msra.mxu0 %v1059
      %1174 = vmatprep.subr.bf16.mxu0 0
      %1175 = vmatpush1.bf16.msra.mxu0 %v1060
      %1176 = vmatprep.subr.bf16.mxu0 0
      %1177 = vmatpush1.bf16.msra.mxu0 %v1061
      %1178 = vmatprep.subr.bf16.mxu0 0
      %1179 = vmatpush1.bf16.msra.mxu0 %v1062
      %1180 = vmatprep.subr.bf16.mxu0 0
      %1181 = vmatpush1.bf16.msra.mxu0 %v1063
      %1182 = vmatprep.subr.bf16.mxu0 0
      %1183 = vmatpush1.bf16.msra.mxu0 %v1064
      %1184 = vmatprep.subr.bf16.mxu0 0
      %1185 = vmatpush1.bf16.msra.mxu0 %v1065
      %1186 = vmatprep.subr.bf16.mxu0 0
      %1187 = vmatpush1.bf16.msra.mxu0 %v1066
      %1188 = vmatprep.subr.bf16.mxu0 0
      %1189 = vmatpush1.bf16.msra.mxu0 %v1067
      %1190 = vmatprep.subr.bf16.mxu0 0
      %1191 = vmatpush1.bf16.msra.mxu0 %v1068
      %1192 = vmatprep.subr.bf16.mxu0 0
      %1193 = vmatpush1.bf16.msra.mxu0 %v1069
      %1194 = vmatprep.subr.bf16.mxu0 0
      %1195 = vmatpush1.bf16.msra.mxu0 %v1070
      %1196 = vmatprep.subr.bf16.mxu0 0
      %1197 = vmatpush1.bf16.msra.mxu0 %v1071
      %1198 = vmatprep.subr.bf16.mxu0 0
      %1199 = vmatpush1.bf16.msra.mxu0 %v1072
      %1200 = vmatprep.subr.bf16.mxu0 0
      %1201 = vmatpush1.bf16.msra.mxu0 %v1073
      %1202 = vmatprep.subr.bf16.mxu0 0
      %1203 = vmatpush1.bf16.msra.mxu0 %v1074
      %1204 = vmatprep.mubr.bf16.mxu0 %v789
      %1205 = vmatmul.mubr.bf16.gmra.mrb[0].mxu0 %v788
      %v1206 = vpop.f32.mrb[0].mxu0
      %v1207 = vadd.f32 %v1158, %v1206
      %v1208 = vpop.f32.mrb[0].mxu0
      %v1209 = vpop.f32.mrb[0].mxu0
      %v1210 = vadd.f32 %v1161, %v1209
      %v1211 = vpop.f32.mrb[0].mxu0
      %1212 = vmatprep.mubr.bf16.mxu0 %v794
      %1213 = vmatmul.mubr.bf16.gmra.mrb[0].mxu0 %v793
      %v1214 = vpop.f32.mrb[0].mxu0
      %v1215 = vadd.f32 %v1166, %v1214
      %v1216 = vpop.f32.mrb[0].mxu0
      %v1217 = vpop.f32.mrb[0].mxu0
      %v1218 = vadd.f32 %v1169, %v1217
      %v1219 = vpop.f32.mrb[0].mxu0
      %1220 = vdwg.mxu0
      %1221 = vmatprep.subr.bf16.mxu0 0
      %1222 = vmatpush1.bf16.msra.mxu0 %v1075
      %1223 = vmatprep.subr.bf16.mxu0 0
      %1224 = vmatpush1.bf16.msra.mxu0 %v1076
      %1225 = vmatprep.subr.bf16.mxu0 0
      %1226 = vmatpush1.bf16.msra.mxu0 %v1077
      %1227 = vmatprep.subr.bf16.mxu0 0
      %1228 = vmatpush1.bf16.msra.mxu0 %v1078
      %1229 = vmatprep.subr.bf16.mxu0 0
      %1230 = vmatpush1.bf16.msra.mxu0 %v1079
      %1231 = vmatprep.subr.bf16.mxu0 0
      %1232 = vmatpush1.bf16.msra.mxu0 %v1080
      %1233 = vmatprep.subr.bf16.mxu0 0
      %1234 = vmatpush1.bf16.msra.mxu0 %v1081
      %1235 = vmatprep.subr.bf16.mxu0 0
      %1236 = vmatpush1.bf16.msra.mxu0 %v1082
      %1237 = vmatprep.subr.bf16.mxu0 0
      %1238 = vmatpush1.bf16.msra.mxu0 0
      %1239 = vmatprep.subr.bf16.mxu0 0
      %1240 = vmatpush1.bf16.msra.mxu0 0
      %1241 = vmatprep.subr.bf16.mxu0 0
      %1242 = vmatpush1.bf16.msra.mxu0 0
      %1243 = vmatprep.subr.bf16.mxu0 0
      %1244 = vmatpush1.bf16.msra.mxu0 0
      %1245 = vmatprep.subr.bf16.mxu0 0
      %1246 = vmatpush1.bf16.msra.mxu0 0
      %1247 = vmatprep.subr.bf16.mxu0 0
      %1248 = vmatpush1.bf16.msra.mxu0 0
      %1249 = vmatprep.subr.bf16.mxu0 0
      %1250 = vmatpush1.bf16.msra.mxu0 0
      %1251 = vmatprep.subr.bf16.mxu0 0
      %1252 = vmatpush1.bf16.msra.mxu0 0
      %1253 = vmatprep.mubr.bf16.mxu0 0
      %1254 = vmatmul.mubr.bf16.gmra.mrb[0].mxu0 %v790
      %v1255 = vpop.f32.mrb[0].mxu0
      %v1256 = vadd.f32 %v1207, %v1255
      %v1257 = vpop.f32.mrb[0].mxu0
      %v1258 = vpop.f32.mrb[0].mxu0
      %v1259 = vadd.f32 %v1210, %v1258
      %v1260 = vpop.f32.mrb[0].mxu0
      %1261 = vmatprep.mubr.bf16.mxu0 0
      %1262 = vmatmul.mubr.bf16.gmra.mrb[0].mxu0 %v795
      %v1263 = vpop.f32.mrb[0].mxu0
      %v1264 = vadd.f32 %v1215, %v1263
      %v1265 = vpop.f32.mrb[0].mxu0
      %v1266 = vpop.f32.mrb[0].mxu0
      %v1267 = vadd.f32 %v1218, %v1266
      %v1268 = vpop.f32.mrb[0].mxu0
      %1269 = vdwg.mxu0
      %v1270 = vmax.f32 %v1256, 0.0
      %v1271 = vmax.f32 %v1259, 0.0
      %v1272 = vmax.f32 %v1264, 0.0
      %v1273 = vmax.f32 %v1267, 0.0
      %1274 = vst [vmem:[#allocation2] sm:$0x3] 0.0
      %v1279 = vrot.slane %v1270, 6
      %v1280 = vrot.slane %v1271, 6
      %v1281 = vsel %vm695, %v1279, %v1280
      %v1282 = vrot.slane %v1272, 6
      %v1283 = vsel %vm695, %v1280, %v1282
      %v1284 = vrot.slane %v1273, 6
      %v1285 = vsel %vm695, %v1282, %v1284
      %1290 = vst [vmem:[#allocation2] sm:$0xfc] %v1279
      %1291 = vst [vmem:[#allocation2 + $0x28] sm:$0xff] %v1281
      %1292 = vst [vmem:[#allocation2 + $0x50] sm:$0xff] %v1283
      %1293 = vst [vmem:[#allocation2 + $0x78] sm:$0xff] %v1285
      %1294 = vst [vmem:[#allocation2 + $0x8] sm:$0x1] 0.0
      %v1295 = vrot.slane %v1270, 7
      %v1296 = vrot.slane %v1271, 7
      %v1297 = vsel %vm712, %v1295, %v1296
      %v1298 = vrot.slane %v1272, 7
      %v1299 = vsel %vm712, %v1296, %v1298
      %v1300 = vrot.slane %v1273, 7
      %v1301 = vsel %vm712, %v1298, %v1300
      %1306 = vst [vmem:[#allocation2 + $0x8] sm:$0xfe] %v1295
      %1307 = vst [vmem:[#allocation2 + $0x30] sm:$0xff] %v1297
      %1308 = vst [vmem:[#allocation2 + $0x58] sm:$0xff] %v1299
      %1309 = vst [vmem:[#allocation2 + $0x80] sm:$0xff] %v1301
      %1310 = vst [vmem:[#allocation2 + $0x10] sm:$0xff] %v1270
      %1311 = vst [vmem:[#allocation2 + $0x38] sm:$0xff] %v1271
      %1312 = vst [vmem:[#allocation2 + $0x60] sm:$0xff] %v1272
      %1313 = vst [vmem:[#allocation2 + $0x88] sm:$0xff] %v1273
      %v1314 = vrot.slane %v1270, 1
      %v1315 = vrot.slane %v1271, 1
      %v1316 = vsel %vm732, %v1314, %v1315
      %v1317 = vrot.slane %v1272, 1
      %v1318 = vsel %vm732, %v1315, %v1317
      %v1319 = vrot.slane %v1273, 1
      %v1320 = vsel %vm732, %v1317, %v1319
      %1325 = vst [vmem:[#allocation2 + $0x18] sm:$0xff] %v1316
      %1326 = vst [vmem:[#allocation2 + $0x40] sm:$0xff] %v1318
      %1327 = vst [vmem:[#allocation2 + $0x68] sm:$0xff] %v1320
      %1328 = vst [vmem:[#allocation2 + $0x90] sm:$0x7f] %v1319
      %1329 = vst [vmem:[#allocation2 + $0x97] sm:$0x1] 0.0
      %v1330 = vrot.slane %v1270, 2
      %v1331 = vrot.slane %v1271, 2
      %v1332 = vsel %vm749, %v1330, %v1331
      %v1333 = vrot.slane %v1272, 2
      %v1334 = vsel %vm749, %v1331, %v1333
      %v1335 = vrot.slane %v1273, 2
      %v1336 = vsel %vm749, %v1333, %v1335
      %1341 = vst [vmem:[#allocation2 + $0x20] sm:$0xff] %v1332
      %1342 = vst [vmem:[#allocation2 + $0x48] sm:$0xff] %v1334
      %1343 = vst [vmem:[#allocation2 + $0x70] sm:$0xff] %v1336
      %1344 = vst [vmem:[#allocation2 + $0x98] sm:$0x3f] %v1335
      %1345 = vst [vmem:[#allocation2 + $0x98] sm:$0xc0] 0.0
      %v1346 = vld [vmem:[#allocation2] sm:$0xff]
      %v1347 = vld [vmem:[#allocation2 + $0x8] sm:$0xff]
      %v1348 = vld [vmem:[#allocation2 + $0x10] sm:$0xff]
      %v1349 = vld [vmem:[#allocation2 + $0x18] sm:$0xff]
      %v1350 = vld [vmem:[#allocation2 + $0x20] sm:$0xff]
      %v1351 = vld [vmem:[#allocation2 + $0x28] sm:$0xff]
      %v1352 = vld [vmem:[#allocation2 + $0x30] sm:$0xff]
      %v1353 = vld [vmem:[#allocation2 + $0x38] sm:$0xff]
      %v1354 = vld [vmem:[#allocation2 + $0x40] sm:$0xff]
      %v1355 = vld [vmem:[#allocation2 + $0x48] sm:$0xff]
      %v1356 = vld [vmem:[#allocation2 + $0x50] sm:$0xff]
      %v1357 = vld [vmem:[#allocation2 + $0x58] sm:$0xff]
      %v1358 = vld [vmem:[#allocation2 + $0x60] sm:$0xff]
      %v1359 = vld [vmem:[#allocation2 + $0x68] sm:$0xff]
      %v1360 = vld [vmem:[#allocation2 + $0x70] sm:$0xff]
      %v1361 = vld [vmem:[#allocation2 + $0x78] sm:$0xff]
      %v1362 = vld [vmem:[#allocation2 + $0x80] sm:$0xff]
      %v1363 = vld [vmem:[#allocation2 + $0x88] sm:$0xff]
      %v1364 = vld [vmem:[#allocation2 + $0x90] sm:$0xff]
      %v1365 = vld [vmem:[#allocation2 + $0x98] sm:$0xff]
      %v1366 = vpack.c.bf16 %v1351, %v1346
      %v1367 = vpack.c.bf16 %v1352, %v1347
      %v1368 = vpack.c.bf16 %v1353, %v1348
      %v1369 = vpack.c.bf16 %v1354, %v1349
      %v1370 = vpack.c.bf16 %v1355, %v1350
      %v1371 = vpack.c.bf16 %v1361, %v1356
      %v1372 = vpack.c.bf16 %v1362, %v1357
      %v1373 = vpack.c.bf16 %v1363, %v1358
      %v1374 = vpack.c.bf16 %v1364, %v1359
      %v1375 = vpack.c.bf16 %v1365, %v1360
      %v1376 = vld [vmem:[%s9] sm:$0xf]
      %v1377 = vld [vmem:[%s9 + $0x4] sm:$0xf]
      %v1378 = vld [vmem:[%s9 + $0x8] sm:$0xf]
      %v1379 = vld [vmem:[%s9 + $0xc] sm:$0xf]
      %v1380 = vld [vmem:[%s9 + $0x10] sm:$0xf]
      %v1381 = vld [vmem:[%s9 + $0x14] sm:$0xf]
      %v1382 = vld [vmem:[%s9 + $0x18] sm:$0xf]
      %v1383 = vld [vmem:[%s9 + $0x1c] sm:$0xf]
      %v1384 = vld [vmem:[%s9 + $0x20] sm:$0xf]
      %v1385 = vld [vmem:[%s9 + $0x24] sm:$0xf]
      %v1386 = vld [vmem:[%s9 + $0x28] sm:$0xf]
      %v1387 = vld [vmem:[%s9 + $0x2c] sm:$0xf]
      %v1388 = vld [vmem:[%s9 + $0x30] sm:$0xf]
      %v1389 = vld [vmem:[%s9 + $0x34] sm:$0xf]
      %v1390 = vld [vmem:[%s9 + $0x38] sm:$0xf]
      %v1391 = vld [vmem:[%s9 + $0x3c] sm:$0xf]
      %v1392 = vld [vmem:[%s9 + $0x40] sm:$0xf]
      %v1393 = vld [vmem:[%s9 + $0x44] sm:$0xf]
      %v1394 = vld [vmem:[%s9 + $0x48] sm:$0xf]
      %v1395 = vld [vmem:[%s9 + $0x4c] sm:$0xf]
      %v1396 = vld [vmem:[%s9 + $0x50] sm:$0xf]
      %v1397 = vld [vmem:[%s9 + $0x54] sm:$0xf]
      %v1398 = vld [vmem:[%s9 + $0x58] sm:$0xf]
      %v1399 = vld [vmem:[%s9 + $0x5c] sm:$0xf]
      %v1400 = vld [vmem:[%s9 + $0x60] sm:$0xf]
      %v1401 = vld [vmem:[%s9 + $0x64] sm:$0xf]
      %v1402 = vld [vmem:[%s9 + $0x68] sm:$0xf]
      %v1403 = vld [vmem:[%s9 + $0x6c] sm:$0xf]
      %v1404 = vld [vmem:[%s9 + $0x70] sm:$0xf]
      %v1405 = vld [vmem:[%s9 + $0x74] sm:$0xf]
      %v1406 = vld [vmem:[%s9 + $0x78] sm:$0xf]
      %v1407 = vld [vmem:[%s9 + $0x7c] sm:$0xf]
      %v1408 = vld [vmem:[%s9 + $0x80] sm:$0xf]
      %v1409 = vld [vmem:[%s9 + $0x84] sm:$0xf]
      %v1410 = vld [vmem:[%s9 + $0x88] sm:$0xf]
      %v1411 = vld [vmem:[%s9 + $0x8c] sm:$0xf]
      %v1412 = vld [vmem:[%s9 + $0x90] sm:$0xf]
      %v1413 = vld [vmem:[%s9 + $0x94] sm:$0xf]
      %v1414 = vld [vmem:[%s9 + $0x98] sm:$0xf]
      %v1415 = vld [vmem:[%s9 + $0x9c] sm:$0xf]
      %v1416 = vld [vmem:[%s9 + $0xa0] sm:$0xf]
      %v1417 = vld [vmem:[%s9 + $0xa4] sm:$0xf]
      %v1418 = vld [vmem:[%s9 + $0xa8] sm:$0xf]
      %v1419 = vld [vmem:[%s9 + $0xac] sm:$0xf]
      %v1420 = vld [vmem:[%s9 + $0xb0] sm:$0xf]
      %v1421 = vld [vmem:[%s9 + $0xb4] sm:$0xf]
      %v1422 = vld [vmem:[%s9 + $0xb8] sm:$0xf]
      %v1423 = vld [vmem:[%s9 + $0xbc] sm:$0xf]
      %v1424 = vld [vmem:[%s9 + $0xc0] sm:$0xf]
      %v1425 = vld [vmem:[%s9 + $0xc4] sm:$0xf]
      %v1426 = vld [vmem:[%s9 + $0xc8] sm:$0xf]
      %v1427 = vld [vmem:[%s9 + $0xcc] sm:$0xf]
      %v1428 = vld [vmem:[%s9 + $0xd0] sm:$0xf]
      %v1429 = vld [vmem:[%s9 + $0xd4] sm:$0xf]
      %v1430 = vld [vmem:[%s9 + $0xd8] sm:$0xf]
      %v1431 = vld [vmem:[%s9 + $0xdc] sm:$0xf]
      %v1432 = vld [vmem:[%s9 + $0xe0] sm:$0xf]
      %v1433 = vld [vmem:[%s9 + $0xe4] sm:$0xf]
      %v1434 = vld [vmem:[%s9 + $0xe8] sm:$0xf]
      %v1435 = vld [vmem:[%s9 + $0xec] sm:$0xf]
      %v1436 = vld [vmem:[%s9 + $0xf0] sm:$0xf]
      %v1437 = vld [vmem:[%s9 + $0xf4] sm:$0xf]
      %v1438 = vld [vmem:[%s9 + $0xf8] sm:$0xf]
      %v1439 = vld [vmem:[%s9 + $0xfc] sm:$0xf]
      %v1440 = vld [vmem:[%s9 + $0x100] sm:$0xf]
      %v1441 = vld [vmem:[%s9 + $0x104] sm:$0xf]
      %v1442 = vld [vmem:[%s9 + $0x108] sm:$0xf]
      %v1443 = vld [vmem:[%s9 + $0x10c] sm:$0xf]
      %v1444 = vld [vmem:[%s9 + $0x110] sm:$0xf]
      %v1445 = vld [vmem:[%s9 + $0x114] sm:$0xf]
      %v1446 = vld [vmem:[%s9 + $0x118] sm:$0xf]
      %v1447 = vld [vmem:[%s9 + $0x11c] sm:$0xf]
      %v1448 = vld [vmem:[%s9 + $0x120] sm:$0xf]
      %v1449 = vld [vmem:[%s9 + $0x124] sm:$0xf]
      %v1450 = vld [vmem:[%s9 + $0x128] sm:$0xf]
      %v1451 = vld [vmem:[%s9 + $0x12c] sm:$0xf]
      %v1452 = vld [vmem:[%s9 + $0x130] sm:$0xf]
      %v1453 = vld [vmem:[%s9 + $0x134] sm:$0xf]
      %v1454 = vld [vmem:[%s9 + $0x138] sm:$0xf]
      %v1455 = vld [vmem:[%s9 + $0x13c] sm:$0xf]
      %v1456 = vld [vmem:[%s10] sm:$0x1]
      %v1458 = vlaneseq
      %v1459 = vshrl.u32 %v1458, 7
      %v1460 = vsub.s32 0, %v1459
      %v1461 = vrot.slane %v1456, %v1460
      %v1543 = vunpack.c.l.b16 %v1376
      %v1544 = vunpack.c.l.b16 %v1377
      %v1545 = vunpack.c.l.b16 %v1378
      %v1546 = vunpack.c.l.b16 %v1379
      %v1547 = vunpack.c.l.b16 %v1380
      %v1548 = vunpack.c.l.b16 %v1381
      %v1549 = vunpack.c.l.b16 %v1382
      %v1550 = vunpack.c.l.b16 %v1383
      %v1551 = vunpack.c.l.b16 %v1384
      %v1552 = vunpack.c.l.b16 %v1385
      %v1553 = vunpack.c.l.b16 %v1386
      %v1554 = vunpack.c.l.b16 %v1387
      %v1555 = vunpack.c.l.b16 %v1388
      %v1556 = vunpack.c.l.b16 %v1389
      %v1557 = vunpack.c.l.b16 %v1390
      %v1558 = vunpack.c.l.b16 %v1391
      %v1559 = vunpack.c.l.b16 %v1392
      %v1560 = vunpack.c.l.b16 %v1393
      %v1561 = vunpack.c.l.b16 %v1394
      %v1562 = vunpack.c.l.b16 %v1395
      %v1563 = vunpack.c.l.b16 %v1396
      %v1564 = vunpack.c.l.b16 %v1397
      %v1565 = vunpack.c.l.b16 %v1398
      %v1566 = vunpack.c.l.b16 %v1399
      %v1567 = vunpack.c.l.b16 %v1400
      %v1568 = vunpack.c.l.b16 %v1401
      %v1569 = vunpack.c.l.b16 %v1402
      %v1570 = vunpack.c.l.b16 %v1403
      %v1571 = vunpack.c.l.b16 %v1404
      %v1572 = vunpack.c.l.b16 %v1405
      %v1573 = vunpack.c.l.b16 %v1406
      %v1574 = vunpack.c.l.b16 %v1407
      %v1575 = vunpack.c.l.b16 %v1408
      %v1576 = vunpack.c.l.b16 %v1409
      %v1577 = vunpack.c.l.b16 %v1410
      %v1578 = vunpack.c.l.b16 %v1411
      %v1579 = vunpack.c.l.b16 %v1412
      %v1580 = vunpack.c.l.b16 %v1413
      %v1581 = vunpack.c.l.b16 %v1414
      %v1582 = vunpack.c.l.b16 %v1415
      %v1583 = vunpack.c.l.b16 %v1416
      %v1584 = vunpack.c.l.b16 %v1417
      %v1585 = vunpack.c.l.b16 %v1418
      %v1586 = vunpack.c.l.b16 %v1419
      %v1587 = vunpack.c.l.b16 %v1420
      %v1588 = vunpack.c.l.b16 %v1421
      %v1589 = vunpack.c.l.b16 %v1422
      %v1590 = vunpack.c.l.b16 %v1423
      %v1591 = vunpack.c.l.b16 %v1424
      %v1592 = vunpack.c.l.b16 %v1425
      %v1593 = vunpack.c.l.b16 %v1426
      %v1594 = vunpack.c.l.b16 %v1427
      %v1595 = vunpack.c.l.b16 %v1428
      %v1596 = vunpack.c.l.b16 %v1429
      %v1597 = vunpack.c.l.b16 %v1430
      %v1598 = vunpack.c.l.b16 %v1431
      %v1599 = vunpack.c.l.b16 %v1432
      %v1600 = vunpack.c.l.b16 %v1433
      %v1601 = vunpack.c.l.b16 %v1434
      %v1602 = vunpack.c.l.b16 %v1435
      %v1603 = vunpack.c.l.b16 %v1436
      %v1604 = vunpack.c.l.b16 %v1437
      %v1605 = vunpack.c.l.b16 %v1438
      %v1606 = vunpack.c.l.b16 %v1439
      %v1607 = vunpack.c.l.b16 %v1440
      %v1608 = vunpack.c.l.b16 %v1441
      %v1609 = vunpack.c.l.b16 %v1442
      %v1610 = vunpack.c.l.b16 %v1443
      %v1611 = vunpack.c.l.b16 %v1444
      %v1612 = vunpack.c.l.b16 %v1445
      %v1613 = vunpack.c.l.b16 %v1446
      %v1614 = vunpack.c.l.b16 %v1447
      %v1615 = vunpack.c.l.b16 %v1448
      %v1616 = vunpack.c.l.b16 %v1449
      %v1617 = vunpack.c.l.b16 %v1450
      %v1618 = vunpack.c.l.b16 %v1451
      %v1619 = vunpack.c.l.b16 %v1452
      %v1620 = vunpack.c.l.b16 %v1453
      %v1621 = vunpack.c.l.b16 %v1454
      %v1622 = vunpack.c.l.b16 %v1455
      %v1623 = vpack.c.b16 %v1544, %v1543
      %v1624 = vpack.c.b16 %v1546, %v1545
      %v1625 = vpack.c.b16 %v1548, %v1547
      %v1626 = vpack.c.b16 %v1550, %v1549
      %v1627 = vpack.c.b16 %v1552, %v1551
      %v1628 = vpack.c.b16 %v1554, %v1553
      %v1629 = vpack.c.b16 %v1556, %v1555
      %v1630 = vpack.c.b16 %v1558, %v1557
      %v1631 = vpack.c.b16 %v1560, %v1559
      %v1632 = vpack.c.b16 %v1562, %v1561
      %v1633 = vpack.c.b16 %v1564, %v1563
      %v1634 = vpack.c.b16 %v1566, %v1565
      %v1635 = vpack.c.b16 %v1568, %v1567
      %v1636 = vpack.c.b16 %v1570, %v1569
      %v1637 = vpack.c.b16 %v1572, %v1571
      %v1638 = vpack.c.b16 %v1574, %v1573
      %v1639 = vpack.c.b16 %v1576, %v1575
      %v1640 = vpack.c.b16 %v1578, %v1577
      %v1641 = vpack.c.b16 %v1580, %v1579
      %v1642 = vpack.c.b16 %v1582, %v1581
      %v1643 = vpack.c.b16 %v1584, %v1583
      %v1644 = vpack.c.b16 %v1586, %v1585
      %v1645 = vpack.c.b16 %v1588, %v1587
      %v1646 = vpack.c.b16 %v1590, %v1589
      %v1647 = vpack.c.b16 %v1592, %v1591
      %v1648 = vpack.c.b16 %v1594, %v1593
      %v1649 = vpack.c.b16 %v1596, %v1595
      %v1650 = vpack.c.b16 %v1598, %v1597
      %v1651 = vpack.c.b16 %v1600, %v1599
      %v1652 = vpack.c.b16 %v1602, %v1601
      %v1653 = vpack.c.b16 %v1604, %v1603
      %v1654 = vpack.c.b16 %v1606, %v1605
      %v1655 = vpack.c.b16 %v1608, %v1607
      %v1656 = vpack.c.b16 %v1610, %v1609
      %v1657 = vpack.c.b16 %v1612, %v1611
      %v1658 = vpack.c.b16 %v1614, %v1613
      %v1659 = vpack.c.b16 %v1616, %v1615
      %v1660 = vpack.c.b16 %v1618, %v1617
      %v1661 = vpack.c.b16 %v1620, %v1619
      %v1662 = vpack.c.b16 %v1622, %v1621
      %1703 = vmatprep.subr.bf16.mxu0 0
      %1704 = vmatpush1.bf16.msra.mxu0 %v1623
      %1705 = vmatprep.subr.bf16.mxu0 0
      %1706 = vmatpush1.bf16.msra.mxu0 %v1624
      %1707 = vmatprep.subr.bf16.mxu0 0
      %1708 = vmatpush1.bf16.msra.mxu0 %v1625
      %1709 = vmatprep.subr.bf16.mxu0 0
      %1710 = vmatpush1.bf16.msra.mxu0 %v1626
      %1711 = vmatprep.subr.bf16.mxu0 0
      %1712 = vmatpush1.bf16.msra.mxu0 %v1627
      %1713 = vmatprep.subr.bf16.mxu0 0
      %1714 = vmatpush1.bf16.msra.mxu0 %v1628
      %1715 = vmatprep.subr.bf16.mxu0 0
      %1716 = vmatpush1.bf16.msra.mxu0 %v1629
      %1717 = vmatprep.subr.bf16.mxu0 0
      %1718 = vmatpush1.bf16.msra.mxu0 %v1630
      %1719 = vmatprep.subr.bf16.mxu0 0
      %1720 = vmatpush1.bf16.msra.mxu0 %v1631
      %1721 = vmatprep.subr.bf16.mxu0 0
      %1722 = vmatpush1.bf16.msra.mxu0 %v1632
      %1723 = vmatprep.subr.bf16.mxu0 0
      %1724 = vmatpush1.bf16.msra.mxu0 %v1633
      %1725 = vmatprep.subr.bf16.mxu0 0
      %1726 = vmatpush1.bf16.msra.mxu0 %v1634
      %1727 = vmatprep.subr.bf16.mxu0 0
      %1728 = vmatpush1.bf16.msra.mxu0 %v1635
      %1729 = vmatprep.subr.bf16.mxu0 0
      %1730 = vmatpush1.bf16.msra.mxu0 %v1636
      %1731 = vmatprep.subr.bf16.mxu0 0
      %1732 = vmatpush1.bf16.msra.mxu0 %v1637
      %1733 = vmatprep.subr.bf16.mxu0 0
      %1734 = vmatpush1.bf16.msra.mxu0 %v1638
      %1735 = vmatprep.mubr.bf16.mxu0 %v1367
      %1736 = vmatmul.mubr.bf16.gmra.mrb[0].mxu0 %v1366
      %v1737 = vpop.f32.mrb[0].mxu0
      %v1738 = vadd.f32 %v1461, %v1737
      %v1739 = vpop.f32.mrb[0].mxu0
      %v1740 = vpop.f32.mrb[0].mxu0
      %v1741 = vadd.f32 %v1461, %v1740
      %v1742 = vpop.f32.mrb[0].mxu0
      %1743 = vmatprep.mubr.bf16.mxu0 %v1372
      %1744 = vmatmul.mubr.bf16.gmra.mrb[0].mxu0 %v1371
      %v1745 = vpop.f32.mrb[0].mxu0
      %v1746 = vadd.f32 %v1461, %v1745
      %v1747 = vpop.f32.mrb[0].mxu0
      %v1748 = vpop.f32.mrb[0].mxu0
      %v1749 = vadd.f32 %v1461, %v1748
      %v1750 = vpop.f32.mrb[0].mxu0
      %1751 = vdwg.mxu0
      %1752 = vmatprep.subr.bf16.mxu0 0
      %1753 = vmatpush1.bf16.msra.mxu0 %v1639
      %1754 = vmatprep.subr.bf16.mxu0 0
      %1755 = vmatpush1.bf16.msra.mxu0 %v1640
      %1756 = vmatprep.subr.bf16.mxu0 0
      %1757 = vmatpush1.bf16.msra.mxu0 %v1641
      %1758 = vmatprep.subr.bf16.mxu0 0
      %1759 = vmatpush1.bf16.msra.mxu0 %v1642
      %1760 = vmatprep.subr.bf16.mxu0 0
      %1761 = vmatpush1.bf16.msra.mxu0 %v1643
      %1762 = vmatprep.subr.bf16.mxu0 0
      %1763 = vmatpush1.bf16.msra.mxu0 %v1644
      %1764 = vmatprep.subr.bf16.mxu0 0
      %1765 = vmatpush1.bf16.msra.mxu0 %v1645
      %1766 = vmatprep.subr.bf16.mxu0 0
      %1767 = vmatpush1.bf16.msra.mxu0 %v1646
      %1768 = vmatprep.subr.bf16.mxu0 0
      %1769 = vmatpush1.bf16.msra.mxu0 %v1647
      %1770 = vmatprep.subr.bf16.mxu0 0
      %1771 = vmatpush1.bf16.msra.mxu0 %v1648
      %1772 = vmatprep.subr.bf16.mxu0 0
      %1773 = vmatpush1.bf16.msra.mxu0 %v1649
      %1774 = vmatprep.subr.bf16.mxu0 0
      %1775 = vmatpush1.bf16.msra.mxu0 %v1650
      %1776 = vmatprep.subr.bf16.mxu0 0
      %1777 = vmatpush1.bf16.msra.mxu0 %v1651
      %1778 = vmatprep.subr.bf16.mxu0 0
      %1779 = vmatpush1.bf16.msra.mxu0 %v1652
      %1780 = vmatprep.subr.bf16.mxu0 0
      %1781 = vmatpush1.bf16.msra.mxu0 %v1653
      %1782 = vmatprep.subr.bf16.mxu0 0
      %1783 = vmatpush1.bf16.msra.mxu0 %v1654
      %1784 = vmatprep.mubr.bf16.mxu0 %v1369
      %1785 = vmatmul.mubr.bf16.gmra.mrb[0].mxu0 %v1368
      %v1786 = vpop.f32.mrb[0].mxu0
      %v1787 = vadd.f32 %v1738, %v1786
      %v1788 = vpop.f32.mrb[0].mxu0
      %v1789 = vpop.f32.mrb[0].mxu0
      %v1790 = vadd.f32 %v1741, %v1789
      %v1791 = vpop.f32.mrb[0].mxu0
      %1792 = vmatprep.mubr.bf16.mxu0 %v1374
      %1793 = vmatmul.mubr.bf16.gmra.mrb[0].mxu0 %v1373
      %v1794 = vpop.f32.mrb[0].mxu0
      %v1795 = vadd.f32 %v1746, %v1794
      %v1796 = vpop.f32.mrb[0].mxu0
      %v1797 = vpop.f32.mrb[0].mxu0
      %v1798 = vadd.f32 %v1749, %v1797
      %v1799 = vpop.f32.mrb[0].mxu0
      %1800 = vdwg.mxu0
      %1801 = vmatprep.subr.bf16.mxu0 0
      %1802 = vmatpush1.bf16.msra.mxu0 %v1655
      %1803 = vmatprep.subr.bf16.mxu0 0
      %1804 = vmatpush1.bf16.msra.mxu0 %v1656
      %1805 = vmatprep.subr.bf16.mxu0 0
      %1806 = vmatpush1.bf16.msra.mxu0 %v1657
      %1807 = vmatprep.subr.bf16.mxu0 0
      %1808 = vmatpush1.bf16.msra.mxu0 %v1658
      %1809 = vmatprep.subr.bf16.mxu0 0
      %1810 = vmatpush1.bf16.msra.mxu0 %v1659
      %1811 = vmatprep.subr.bf16.mxu0 0
      %1812 = vmatpush1.bf16.msra.mxu0 %v1660
      %1813 = vmatprep.subr.bf16.mxu0 0
      %1814 = vmatpush1.bf16.msra.mxu0 %v1661
      %1815 = vmatprep.subr.bf16.mxu0 0
      %1816 = vmatpush1.bf16.msra.mxu0 %v1662
      %1817 = vmatprep.subr.bf16.mxu0 0
      %1818 = vmatpush1.bf16.msra.mxu0 0
      %1819 = vmatprep.subr.bf16.mxu0 0
      %1820 = vmatpush1.bf16.msra.mxu0 0
      %1821 = vmatprep.subr.bf16.mxu0 0
      %1822 = vmatpush1.bf16.msra.mxu0 0
      %1823 = vmatprep.subr.bf16.mxu0 0
      %1824 = vmatpush1.bf16.msra.mxu0 0
      %1825 = vmatprep.subr.bf16.mxu0 0
      %1826 = vmatpush1.bf16.msra.mxu0 0
      %1827 = vmatprep.subr.bf16.mxu0 0
      %1828 = vmatpush1.bf16.msra.mxu0 0
      %1829 = vmatprep.subr.bf16.mxu0 0
      %1830 = vmatpush1.bf16.msra.mxu0 0
      %1831 = vmatprep.subr.bf16.mxu0 0
      %1832 = vmatpush1.bf16.msra.mxu0 0
      %1833 = vmatprep.mubr.bf16.mxu0 0
      %1834 = vmatmul.mubr.bf16.gmra.mrb[0].mxu0 %v1370
      %v1835 = vpop.f32.mrb[0].mxu0
      %v1836 = vadd.f32 %v1787, %v1835
      %v1837 = vpop.f32.mrb[0].mxu0
      %v1838 = vpop.f32.mrb[0].mxu0
      %v1839 = vadd.f32 %v1790, %v1838
      %v1840 = vpop.f32.mrb[0].mxu0
      %1841 = vmatprep.mubr.bf16.mxu0 0
      %1842 = vmatmul.mubr.bf16.gmra.mrb[0].mxu0 %v1375
      %v1843 = vpop.f32.mrb[0].mxu0
      %v1844 = vadd.f32 %v1795, %v1843
      %v1845 = vpop.f32.mrb[0].mxu0
      %v1846 = vpop.f32.mrb[0].mxu0
      %v1847 = vadd.f32 %v1798, %v1846
      %v1848 = vpop.f32.mrb[0].mxu0
      %1849 = vdwg.mxu0
      %v1850 = vadd.f32 %v1836, %v686
      %v1851 = vadd.f32 %v1839, %v687
      %v1852 = vadd.f32 %v1844, %v688
      %v1853 = vadd.f32 %v1847, %v689
      %v1854 = vmul.f32 %v1850, %v410
      %v1855 = vmul.f32 %v1851, %v411
      %v1856 = vmul.f32 %v1852, %v412
      %v1857 = vmul.f32 %v1853, %v413
      %1858 = vst [vmem:[%s386] sm:$0xff] %v1854
      %1859 = vst [vmem:[%s386 + $0x8] sm:$0xff] %v1855
      %1860 = vst [vmem:[%s386 + $0x10] sm:$0xff] %v1856
      %1861 = vst [vmem:[%s386 + $0x18] sm:$0xff] %v1857
      %p1862 = scmp.lt.s32.totalorder %s28, 1
      %s1863 = scalar_select %p1862, %s28, 1
      %s1864 = smul.addr %s1863, 4
      %s1865 = smul.addr %s1864, 8
      %s1866 = scalar_lea.vmem %s11, %s1865
      // Predicated region
      $region61: #{_adaptive_decoder_forward.2} parent=59 // pred_check
        %p1867 = pneg %p266
      $region62: #{_adaptive_decoder_forward.2} parent=59 // pred_check_branch
        %1869 = sbr.rel (%p1867) target = $region64
      $region63: #{_adaptive_decoder_forward.2} parent=59 // pred_region
        _
      $region64: #{_adaptive_decoder_forward.2} parent=59 // pred_fallthru
        _
    $region60: #{_adaptive_decoder_forward.2} parent=5 // pred_fallthru
      _
    %p1870 = scmp.le.s32.totalorder 2, %s23
    // Predicated region
    $region65: #{_adaptive_decoder_forward.2} parent=5 // pred_check
      %p1871 = pneg %p1870
    $region66: #{_adaptive_decoder_forward.2} parent=5 // pred_check_branch
      %1873 = sbr.rel (%p1871) target = $region68
    $region67: #{_adaptive_decoder_forward.2} parent=5 // pred_region
      %s1874 = ssub.s32 %s23, 2
      // Predicated region
      $region69: #{_adaptive_decoder_forward.2} parent=67 // pred_check
        %p1875 = pneg %p272
      $region70: #{_adaptive_decoder_forward.2} parent=67 // pred_check_branch
        %1877 = sbr.rel (%p1875) target = $region72
      $region71: #{_adaptive_decoder_forward.2} parent=67 // pred_region
        %p1878 = scmp.lt.s32.totalorder %s29, 1
        %s1879 = scalar_select %p1878, %s29, 1
        %s1880 = smul.addr %s1879, 4
        %s1881 = smul.addr %s1880, 8
        %s1882 = scalar_lea.vmem %s11, %s1881
      $region72: #{_adaptive_decoder_forward.2} parent=67 // pred_fallthru
        _
    $region68: #{_adaptive_decoder_forward.2} parent=5 // pred_fallthru
      _
  $region6: #{_adaptive_decoder_forward.2} parent=0 // loop_footer
    %s27 = sadd.s32 1, %s23
  $region7: #{_adaptive_decoder_forward.2} parent=0 // loop_footer_branch
    %22 = sbr.rel target = $region3
  $region8: #{_adaptive_decoder_forward.2} parent=0 // loop_exit
    _

</llo_original>
